<compile_context>
chip_gen: v7x
topology: tpu7x:2x2x1
jax: 0.10.0
libtpu: 0.0.40
codegen_flags: <defaults>
</compile_context>

<pallas_src>
import functools

import jax
import jax.numpy as jnp
from jax.experimental import pallas as pl
from jax.experimental.pallas import tpu as pltpu


def _cond_aug_kernel(emb_ref, w_ref, b_ref, eps_ref,
                     cond_ref, mu_ref, std_ref, *, cond_dim):
    """Fused Linear + GLU + reparameterization for one batch tile."""
    # Linear: (TB, emb_dim) @ (emb_dim, 4C) + (1, 4C)   -> MXU, f32 accumulate.
    y = jnp.dot(emb_ref[...], w_ref[...], preferred_element_type=jnp.float32)
    y = y + b_ref[...].astype(jnp.float32)

    c2 = 2 * cond_dim
    a = y[:, :c2]                       # linear half of GLU   (lane-aligned slice)
    g = y[:, c2:]                       # gate half of GLU     (lane-aligned slice)
    glu = a * jax.nn.sigmoid(g)         # (TB, 2C)

    mus = glu[:, :cond_dim]
    logvars = glu[:, cond_dim:]
    stds = jnp.exp(logvars * 0.5)

    mu_ref[...] = mus.astype(mu_ref.dtype)
    std_ref[...] = stds.astype(std_ref.dtype)
    cond_ref[...] = (mus + eps_ref[...].astype(jnp.float32) * stds).astype(cond_ref.dtype)


def conditioning_augmentation(emb, weight, bias, eps, *, block_b=256):
    """Pallas implementation of ConditioningAugmentationOLD.forward.

    Args:
      emb:    (B, emb_dim) caption embeddings.
      weight: (emb_dim, 4*cond_dim) Linear weight (already in (in, out) layout).
      bias:   (4*cond_dim,) Linear bias.
      eps:    (B, cond_dim) standard-normal noise (torch.randn_like equivalent,
              generated host-side; in-kernel HW PRNG has no portable lowering).

    Returns:
      (cond, mus, stds), each of shape (B, cond_dim), dtype of `emb`.
    """
    B, emb_dim = emb.shape
    four_c = weight.shape[1]
    cond_dim = four_c // 4
    assert four_c == 4 * cond_dim
    bias2d = bias.reshape(1, four_c)

    # Batch tile: full batch if small (block == full array dim, so no (8,128)
    # constraint issues), otherwise fixed-size pipelined tiles over a 1-D grid.
    tb = B if B <= block_b else block_b
    grid = (pl.cdiv(B, tb),)

    out_shapes = (
        jax.ShapeDtypeStruct((B, cond_dim), emb.dtype),  # cond
        jax.ShapeDtypeStruct((B, cond_dim), emb.dtype),  # mus
        jax.ShapeDtypeStruct((B, cond_dim), emb.dtype),  # stds
    )

    cond, mus, stds = pl.pallas_call(
        functools.partial(_cond_aug_kernel, cond_dim=cond_dim),
        out_shape=out_shapes,
        grid=grid,
        in_specs=[
            pl.BlockSpec((tb, emb_dim), lambda i: (i, 0)),       # emb tile
            pl.BlockSpec((emb_dim, four_c), lambda i: (0, 0)),   # weight (VMEM-resident)
            pl.BlockSpec((1, four_c), lambda i: (0, 0)),         # bias   (VMEM-resident)
            pl.BlockSpec((tb, cond_dim), lambda i: (i, 0)),      # eps tile
        ],
        out_specs=(
            pl.BlockSpec((tb, cond_dim), lambda i: (i, 0)),
            pl.BlockSpec((tb, cond_dim), lambda i: (i, 0)),
            pl.BlockSpec((tb, cond_dim), lambda i: (i, 0)),
        ),
        compiler_params=pltpu.CompilerParams(
            dimension_semantics=("parallel",),
        ),
    )(emb, weight, bias2d, eps)

    return cond, mus, stds


if __name__ == "__main__":
    key = jax.random.PRNGKey(0)
    k_emb, k_w, k_b, k_eps = jax.random.split(key, 4)

    # Module defaults: emb_dim=1024, cond_dim=128; small batch.
    B, emb_dim, cond_dim = 2, 1024, 128

    emb = jax.random.normal(k_emb, (B, emb_dim), dtype=jnp.float32)
    # nn.Linear(emb_dim, 4*cond_dim) parameters, stored as (in, out).
    weight = jax.random.normal(k_w, (emb_dim, 4 * cond_dim), dtype=jnp.float32) * 0.02
    bias = jax.random.normal(k_b, (4 * cond_dim,), dtype=jnp.float32) * 0.01
    # torch.randn_like(stds): Gaussian noise generated with jax.random.
    eps = jax.random.normal(k_eps, (B, cond_dim), dtype=jnp.float32)

    cond, mus, stds = conditioning_augmentation(emb, weight, bias, eps)
    cond, mus, stds = jax.block_until_ready((cond, mus, stds))

    # Pure-JAX reference of the PyTorch forward.
    y_ref = emb @ weight + bias
    a_ref, g_ref = y_ref[:, : 2 * cond_dim], y_ref[:, 2 * cond_dim:]
    glu_ref = a_ref * jax.nn.sigmoid(g_ref)
    mus_ref, logvars_ref = glu_ref[:, :cond_dim], glu_ref[:, cond_dim:]
    stds_ref = jnp.exp(logvars_ref / 2.0)
    cond_ref = mus_ref + eps * stds_ref

    assert bool(jnp.allclose(mus, mus_ref, atol=1e-4, rtol=1e-4)), "mus mismatch"
    assert bool(jnp.allclose(stds, stds_ref, atol=1e-4, rtol=1e-4)), "stds mismatch"
    assert bool(jnp.allclose(cond, cond_ref, atol=1e-4, rtol=1e-4)), "cond mismatch"
    assert cond.shape == (B, cond_dim) and mus.shape == (B, cond_dim) and stds.shape == (B, cond_dim)
    assert cond.dtype == emb.dtype

    print("KERNEL_OK")
</pallas_src>

<mosaic_0001>
module attributes {stable_mosaic.version = 11 : i64} {
  func.func @_cond_aug_kernel(%arg0: i32, %arg1: memref<2x1024xf32, #tpu.memory_space<vmem>>, %arg2: memref<1024x512xf32, #tpu.memory_space<vmem>>, %arg3: memref<1x512xf32, #tpu.memory_space<vmem>>, %arg4: memref<2x128xf32, #tpu.memory_space<vmem>>, %arg5: memref<2x128xf32, #tpu.memory_space<vmem>>, %arg6: memref<2x128xf32, #tpu.memory_space<vmem>>, %arg7: memref<2x128xf32, #tpu.memory_space<vmem>>) attributes {dimension_semantics = [#tpu.dimension_semantics<parallel>], iteration_bounds = array<i64: 1>, scalar_prefetch = 0 : i64, scratch_operands = 0 : i64, tpu.core_type = #tpu.core_type<tc>, window_params = [{transform_indices = @transform_0, window_bounds = array<i64: 2, 1024>}, {pipeline_mode = #tpu.pipeline_mode<synchronous>, transform_indices = @transform_1, window_bounds = array<i64: 1024, 512>}, {pipeline_mode = #tpu.pipeline_mode<synchronous>, transform_indices = @transform_2, window_bounds = array<i64: 1, 512>}, {transform_indices = @transform_3, window_bounds = array<i64: 2, 128>}, {transform_indices = @transform_4, window_bounds = array<i64: 2, 128>}, {transform_indices = @transform_5, window_bounds = array<i64: 2, 128>}, {transform_indices = @transform_6, window_bounds = array<i64: 2, 128>}]} {
    %c0 = arith.constant 0 : index
    %c0_0 = arith.constant 0 : index
    %0 = vector.load %arg1[%c0, %c0_0] : memref<2x1024xf32, #tpu.memory_space<vmem>>, vector<2x1024xf32>
    %c0_1 = arith.constant 0 : index
    %c0_2 = arith.constant 0 : index
    %1 = vector.load %arg2[%c0_1, %c0_2] : memref<1024x512xf32, #tpu.memory_space<vmem>>, vector<1024x512xf32>
    %cst = arith.constant dense<0.000000e+00> : vector<2x512xf32>
    %2 = tpu.matmul %0, %1, %cst {dimension_numbers = #tpu.dot_dimension_numbers<[1], [0], [0], [1], [0, 0, 1, 1], [], []>} : vector<2x1024xf32>, vector<1024x512xf32>, vector<2x512xf32> -> vector<2x512xf32>
    %c0_3 = arith.constant 0 : index
    %c0_4 = arith.constant 0 : index
    %3 = vector.load %arg3[%c0_3, %c0_4] : memref<1x512xf32, #tpu.memory_space<vmem>>, vector<1x512xf32>
    %4 = vector.broadcast %3 : vector<1x512xf32> to vector<2x512xf32>
    %5 = arith.addf %2, %4 : vector<2x512xf32>
    %6 = vector.extract_strided_slice %5 {offsets = [0, 0], sizes = [2, 256], strides = [1, 1]} : vector<2x512xf32> to vector<2x256xf32>
    %7 = vector.extract_strided_slice %5 {offsets = [0, 256], sizes = [2, 256], strides = [1, 1]} : vector<2x512xf32> to vector<2x256xf32>
    %8 = arith.negf %7 : vector<2x256xf32>
    %9 = math.exp %8 : vector<2x256xf32>
    %cst_5 = arith.constant 1.000000e+00 : f32
    %10 = vector.broadcast %cst_5 : f32 to vector<2x256xf32>
    %11 = arith.addf %10, %9 : vector<2x256xf32>
    %12 = arith.divf %10, %11 : vector<2x256xf32>
    %13 = arith.mulf %6, %12 : vector<2x256xf32>
    %14 = vector.extract_strided_slice %13 {offsets = [0, 0], sizes = [2, 128], strides = [1, 1]} : vector<2x256xf32> to vector<2x128xf32>
    %15 = vector.extract_strided_slice %13 {offsets = [0, 128], sizes = [2, 128], strides = [1, 1]} : vector<2x256xf32> to vector<2x128xf32>
    %cst_6 = arith.constant 5.000000e-01 : f32
    %16 = vector.broadcast %cst_6 : f32 to vector<2x128xf32>
    %17 = arith.mulf %15, %16 : vector<2x128xf32>
    %18 = math.exp %17 : vector<2x128xf32>
    %c0_7 = arith.constant 0 : index
    %c0_8 = arith.constant 0 : index
    %19 = vector.load %arg6[%c0_7, %c0_8] : memref<2x128xf32, #tpu.memory_space<vmem>>, vector<2x128xf32>
    tpu.vector_store %arg6[%c0_7, %c0_8], %14 {strides = array<i32>} : memref<2x128xf32, #tpu.memory_space<vmem>>, vector<2x128xf32>,
    %c0_9 = arith.constant 0 : index
    %c0_10 = arith.constant 0 : index
    %20 = vector.load %arg7[%c0_9, %c0_10] : memref<2x128xf32, #tpu.memory_space<vmem>>, vector<2x128xf32>
    tpu.vector_store %arg7[%c0_9, %c0_10], %18 {strides = array<i32>} : memref<2x128xf32, #tpu.memory_space<vmem>>, vector<2x128xf32>,
    %c0_11 = arith.constant 0 : index
    %c0_12 = arith.constant 0 : index
    %21 = vector.load %arg4[%c0_11, %c0_12] : memref<2x128xf32, #tpu.memory_space<vmem>>, vector<2x128xf32>
    %22 = arith.mulf %21, %18 : vector<2x128xf32>
    %23 = arith.addf %14, %22 : vector<2x128xf32>
    %c0_13 = arith.constant 0 : index
    %c0_14 = arith.constant 0 : index
    %24 = vector.load %arg5[%c0_13, %c0_14] : memref<2x128xf32, #tpu.memory_space<vmem>>, vector<2x128xf32>
    tpu.vector_store %arg5[%c0_13, %c0_14], %23 {strides = array<i32>} : memref<2x128xf32, #tpu.memory_space<vmem>>, vector<2x128xf32>,
    return
  }
  func.func @transform_0(%arg0: i32) -> (i32, i32) {
    %c0_i32 = arith.constant 0 : i32
    %c0_i32_0 = arith.constant 0 : i32
    return %arg0, %c0_i32 : i32, i32
  }
  func.func @transform_1(%arg0: i32) -> (i32, i32) {
    %c0_i32 = arith.constant 0 : i32
    %c0_i32_0 = arith.constant 0 : i32
    %c0_i32_1 = arith.constant 0 : i32
    return %c0_i32, %c0_i32_0 : i32, i32
  }
  func.func @transform_2(%arg0: i32) -> (i32, i32) {
    %c0_i32 = arith.constant 0 : i32
    %c0_i32_0 = arith.constant 0 : i32
    %c0_i32_1 = arith.constant 0 : i32
    return %c0_i32, %c0_i32_0 : i32, i32
  }
  func.func @transform_3(%arg0: i32) -> (i32, i32) {
    %c0_i32 = arith.constant 0 : i32
    %c0_i32_0 = arith.constant 0 : i32
    return %arg0, %c0_i32 : i32, i32
  }
  func.func @transform_4(%arg0: i32) -> (i32, i32) {
    %c0_i32 = arith.constant 0 : i32
    %c0_i32_0 = arith.constant 0 : i32
    return %arg0, %c0_i32 : i32, i32
  }
  func.func @transform_5(%arg0: i32) -> (i32, i32) {
    %c0_i32 = arith.constant 0 : i32
    %c0_i32_0 = arith.constant 0 : i32
    return %arg0, %c0_i32 : i32, i32
  }
  func.func @transform_6(%arg0: i32) -> (i32, i32) {
    %c0_i32 = arith.constant 0 : i32
    %c0_i32_0 = arith.constant 0 : i32
    return %arg0, %c0_i32 : i32, i32
  }
}

</mosaic_0001>

<llo_original>
// kernel: tpu_custom_call.1
$region0: #{tpu_custom_call.1}
  #allocation0 [shape = 'u32[]', space=smem, size = 0x4, offset = 0x4, fixed_abs, tag = 'smem constant byte address 0x4 - core index']
  #allocation1 [shape = 'u32[144,128]{1,0:T(1,128)}', space=vmem, size = 0x12000, scoped, tag = 'internal scratch']
  %s0 = inlined_call_operand.hbm [shape: f32[2,1024], index: 0, kind: input, shape index: {}]
  %s1 = inlined_call_operand.hbm [shape: f32[1024,512], index: 1, kind: input, shape index: {}]
  %s2 = inlined_call_operand.hbm [shape: f32[1,512], index: 2, kind: input, shape index: {}]
  %s3 = inlined_call_operand.hbm [shape: f32[2,128], index: 3, kind: input, shape index: {}]
  %s4 = inlined_call_operand.hbm [shape: f32[2,128], index: 4, kind: output, shape index: {0}]
  %s5 = inlined_call_operand.hbm [shape: f32[2,128], index: 5, kind: output, shape index: {1}]
  %s6 = inlined_call_operand.hbm [shape: f32[2,128], index: 6, kind: output, shape index: {2}]
  %7 = xla_tuple %s4, %s5, %s6
  %s8 = sld [smem:[#allocation0]]
  $region58: #{tpu_custom_call.1} parent=0
    _
  %s10 = ssub.s32 1, %s8
  %s11 = scalar_select 0, %s10, %s8
  $region1: #{tpu_custom_call.1} parent=0
    #allocation2 [shape = 'u8[8192]{0}', space=vmem, size = 0x2000, scoped, tag = 'input window, operand 0, single buffered']
    #allocation3 [shape = 's32[1]{0}', space=sflag, size = 0x4, scoped, tag = 'scoped memory for tpu_custom_call.1']
    #allocation4 [shape = 's32[1]{0}', space=sflag, size = 0x4, scoped, tag = 'scoped memory for tpu_custom_call.1']
    #allocation5 [shape = 'u8[2097152]{0}', space=vmem, size = 0x200000, scoped, tag = 'input window, operand 1, single buffered']
    #allocation6 [shape = 's32[1]{0}', space=sflag, size = 0x4, scoped, tag = 'scoped memory for tpu_custom_call.1']
    #allocation7 [shape = 'u8[2048]{0}', space=vmem, size = 0x800, scoped, tag = 'input window, operand 2, single buffered']
    #allocation8 [shape = 'u8[1024]{0}', space=vmem, size = 0x400, scoped, tag = 'input window, operand 3, single buffered']
    #allocation9 [shape = 's32[1]{0}', space=sflag, size = 0x4, scoped, tag = 'scoped memory for tpu_custom_call.1']
    #allocation10 [shape = 'u8[1024]{0}', space=vmem, size = 0x400, scoped, tag = 'output window, operand 0, single buffered']
    #allocation11 [shape = 'u8[1024]{0}', space=vmem, size = 0x400, scoped, tag = 'output window, operand 1, single buffered']
    #allocation12 [shape = 's32[1]{0}', space=sflag, size = 0x4, scoped, tag = 'scoped memory for tpu_custom_call.1']
    #allocation13 [shape = 'u8[1024]{0}', space=vmem, size = 0x400, scoped, tag = 'output window, operand 2, single buffered']
    %12 = vsyncpa [#allocation3], 0
    %13 = vsyncpa [#allocation6], 0
    %14 = vsyncpa [#allocation9], 0
    %15 = vsyncpa [#allocation4], 0
    %16 = vsyncpa [#allocation12], 0
    // Predicated region
    $region2: #{tpu_custom_call.1} parent=1 // pred_check
      _
    $region3: #{tpu_custom_call.1} parent=1 // pred_check_branch
      %18 = sbr.rel (0) target = $region5
    $region4: #{tpu_custom_call.1} parent=1 // pred_region
      %s20 = ssub.s32 256, 256
      %21 = vsyncadd [#allocation3], %s20
      %s23 = sshll.u32 [#allocation2], 4
      %s24 = int_to_ptr.vmem [resolvable:$true] %s23
      %26 = dma.hbm_to_vmem [thread:$0]  %s0, 256, %s24, [#allocation3]
    $region5: #{tpu_custom_call.1} parent=1 // pred_fallthru
      _
    // Predicated region
    $region6: #{tpu_custom_call.1} parent=1 // pred_check
      _
    $region7: #{tpu_custom_call.1} parent=1 // pred_check_branch
      %28 = sbr.rel (0) target = $region9
    $region8: #{tpu_custom_call.1} parent=1 // pred_region
      %s30 = ssub.s32 65536, 65536
      %31 = vsyncadd [#allocation6], %s30
      %s32 = sshll.u32 [#allocation5], 4
      %s33 = int_to_ptr.vmem [resolvable:$true] %s32
      %38 = dma.hbm_to_vmem [thread:$0]  %s1, 65536, %s33, [#allocation6], 512, 512, 32
    $region9: #{tpu_custom_call.1} parent=1 // pred_fallthru
      _
    // Predicated region
    $region10: #{tpu_custom_call.1} parent=1 // pred_check
      _
    $region11: #{tpu_custom_call.1} parent=1 // pred_check_branch
      %40 = sbr.rel (0) target = $region13
    $region12: #{tpu_custom_call.1} parent=1 // pred_region
      %s42 = ssub.s32 64, 64
      %43 = vsyncadd [#allocation6], %s42
      %s45 = sshll.u32 [#allocation7], 4
      %s46 = int_to_ptr.vmem [resolvable:$true] %s45
      %48 = dma.hbm_to_vmem [thread:$0]  %s2, 64, %s46, [#allocation6]
    $region13: #{tpu_custom_call.1} parent=1 // pred_fallthru
      _
    // Predicated region
    $region14: #{tpu_custom_call.1} parent=1 // pred_check
      _
    $region15: #{tpu_custom_call.1} parent=1 // pred_check_branch
      %50 = sbr.rel (0) target = $region17
    $region16: #{tpu_custom_call.1} parent=1 // pred_region
      %s52 = ssub.s32 32, 32
      %53 = vsyncadd [#allocation9], %s52
      %s55 = sshll.u32 [#allocation8], 4
      %s56 = int_to_ptr.vmem [resolvable:$true] %s55
      %58 = dma.hbm_to_vmem [thread:$0]  %s3, 32, %s56, [#allocation9]
    $region17: #{tpu_custom_call.1} parent=1 // pred_fallthru
      _
    // Predicated region
    $region18: #{tpu_custom_call.1} parent=1 // pred_check
      _
    $region19: #{tpu_custom_call.1} parent=1 // pred_check_branch
      %60 = sbr.rel (0) target = $region21
    $region20: #{tpu_custom_call.1} parent=1 // pred_region
      %61 = dma.done [#allocation3], 256
    $region21: #{tpu_custom_call.1} parent=1 // pred_fallthru
      _
    // Predicated region
    $region22: #{tpu_custom_call.1} parent=1 // pred_check
      _
    $region23: #{tpu_custom_call.1} parent=1 // pred_check_branch
      %63 = sbr.rel (0) target = $region25
    $region24: #{tpu_custom_call.1} parent=1 // pred_region
      %64 = dma.done [#allocation6], 65536
    $region25: #{tpu_custom_call.1} parent=1 // pred_fallthru
      _
    // Predicated region
    $region26: #{tpu_custom_call.1} parent=1 // pred_check
      _
    $region27: #{tpu_custom_call.1} parent=1 // pred_check_branch
      %66 = sbr.rel (0) target = $region29
    $region28: #{tpu_custom_call.1} parent=1 // pred_region
      %67 = dma.done [#allocation6], 64
    $region29: #{tpu_custom_call.1} parent=1 // pred_fallthru
      _
    // Predicated region
    $region30: #{tpu_custom_call.1} parent=1 // pred_check
      _
    $region31: #{tpu_custom_call.1} parent=1 // pred_check_branch
      %69 = sbr.rel (0) target = $region33
    $region32: #{tpu_custom_call.1} parent=1 // pred_region
      %70 = dma.done [#allocation9], 32
    $region33: #{tpu_custom_call.1} parent=1 // pred_fallthru
      _
    %v71 = vld [vmem:[#allocation2] sm:$0xff]
    %v72 = vld [vmem:[#allocation2 + $0x8] sm:$0xff]
    %v73 = vld [vmem:[#allocation5] sm:$0xff]
    %v74 = vld [vmem:[#allocation5 + $0x8] sm:$0xff]
    %v75 = vld [vmem:[#allocation5 + $0x10] sm:$0xff]
    %v76 = vld [vmem:[#allocation5 + $0x18] sm:$0xff]
    %v77 = vld [vmem:[#allocation5 + $0x20] sm:$0xff]
    %v78 = vld [vmem:[#allocation5 + $0x28] sm:$0xff]
    %v79 = vld [vmem:[#allocation5 + $0x30] sm:$0xff]
    %v80 = vld [vmem:[#allocation5 + $0x38] sm:$0xff]
    %v81 = vld [vmem:[#allocation5 + $0x40] sm:$0xff]
    %v82 = vld [vmem:[#allocation5 + $0x48] sm:$0xff]
    %v83 = vld [vmem:[#allocation5 + $0x50] sm:$0xff]
    %v84 = vld [vmem:[#allocation5 + $0x58] sm:$0xff]
    %v85 = vld [vmem:[#allocation5 + $0x60] sm:$0xff]
    %v86 = vld [vmem:[#allocation5 + $0x68] sm:$0xff]
    %v87 = vld [vmem:[#allocation5 + $0x70] sm:$0xff]
    %v88 = vld [vmem:[#allocation5 + $0x78] sm:$0xff]
    %v89 = vld [vmem:[#allocation5 + $0x80] sm:$0xff]
    %v90 = vld [vmem:[#allocation5 + $0x88] sm:$0xff]
    %v91 = vld [vmem:[#allocation5 + $0x90] sm:$0xff]
    %v92 = vld [vmem:[#allocation5 + $0x98] sm:$0xff]
    %v93 = vld [vmem:[#allocation5 + $0xa0] sm:$0xff]
    %v94 = vld [vmem:[#allocation5 + $0xa8] sm:$0xff]
    %v95 = vld [vmem:[#allocation5 + $0xb0] sm:$0xff]
    %v96 = vld [vmem:[#allocation5 + $0xb8] sm:$0xff]
    %v97 = vld [vmem:[#allocation5 + $0xc0] sm:$0xff]
    %v98 = vld [vmem:[#allocation5 + $0xc8] sm:$0xff]
    %v99 = vld [vmem:[#allocation5 + $0xd0] sm:$0xff]
    %v100 = vld [vmem:[#allocation5 + $0xd8] sm:$0xff]
    %v101 = vld [vmem:[#allocation5 + $0xe0] sm:$0xff]
    %v102 = vld [vmem:[#allocation5 + $0xe8] sm:$0xff]
    %v103 = vld [vmem:[#allocation5 + $0xf0] sm:$0xff]
    %v104 = vld [vmem:[#allocation5 + $0xf8] sm:$0xff]
    %v105 = vld [vmem:[#allocation5 + $0x100] sm:$0xff]
    %v106 = vld [vmem:[#allocation5 + $0x108] sm:$0xff]
    %v107 = vld [vmem:[#allocation5 + $0x110] sm:$0xff]
    %v108 = vld [vmem:[#allocation5 + $0x118] sm:$0xff]
    %v109 = vld [vmem:[#allocation5 + $0x120] sm:$0xff]
    %v110 = vld [vmem:[#allocation5 + $0x128] sm:$0xff]
    %v111 = vld [vmem:[#allocation5 + $0x130] sm:$0xff]
    %v112 = vld [vmem:[#allocation5 + $0x138] sm:$0xff]
    %v113 = vld [vmem:[#allocation5 + $0x140] sm:$0xff]
    %v114 = vld [vmem:[#allocation5 + $0x148] sm:$0xff]
    %v115 = vld [vmem:[#allocation5 + $0x150] sm:$0xff]
    %v116 = vld [vmem:[#allocation5 + $0x158] sm:$0xff]
    %v117 = vld [vmem:[#allocation5 + $0x160] sm:$0xff]
    %v118 = vld [vmem:[#allocation5 + $0x168] sm:$0xff]
    %v119 = vld [vmem:[#allocation5 + $0x170] sm:$0xff]
    %v120 = vld [vmem:[#allocation5 + $0x178] sm:$0xff]
    %v121 = vld [vmem:[#allocation5 + $0x180] sm:$0xff]
    %v122 = vld [vmem:[#allocation5 + $0x188] sm:$0xff]
    %v123 = vld [vmem:[#allocation5 + $0x190] sm:$0xff]
    %v124 = vld [vmem:[#allocation5 + $0x198] sm:$0xff]
    %v125 = vld [vmem:[#allocation5 + $0x1a0] sm:$0xff]
    %v126 = vld [vmem:[#allocation5 + $0x1a8] sm:$0xff]
    %v127 = vld [vmem:[#allocation5 + $0x1b0] sm:$0xff]
    %v128 = vld [vmem:[#allocation5 + $0x1b8] sm:$0xff]
    %v129 = vld [vmem:[#allocation5 + $0x1c0] sm:$0xff]
    %v130 = vld [vmem:[#allocation5 + $0x1c8] sm:$0xff]
    %v131 = vld [vmem:[#allocation5 + $0x1d0] sm:$0xff]
    %v132 = vld [vmem:[#allocation5 + $0x1d8] sm:$0xff]
    %v133 = vld [vmem:[#allocation5 + $0x1e0] sm:$0xff]
    %v134 = vld [vmem:[#allocation5 + $0x1e8] sm:$0xff]
    %v135 = vld [vmem:[#allocation5 + $0x1f0] sm:$0xff]
    %v136 = vld [vmem:[#allocation5 + $0x1f8] sm:$0xff]
    %v137 = vld [vmem:[#allocation5 + $0x200] sm:$0xff]
    %v138 = vld [vmem:[#allocation5 + $0x208] sm:$0xff]
    %v139 = vld [vmem:[#allocation5 + $0x210] sm:$0xff]
    %v140 = vld [vmem:[#allocation5 + $0x218] sm:$0xff]
    %v141 = vld [vmem:[#allocation5 + $0x220] sm:$0xff]
    %v142 = vld [vmem:[#allocation5 + $0x228] sm:$0xff]
    %v143 = vld [vmem:[#allocation5 + $0x230] sm:$0xff]
    %v144 = vld [vmem:[#allocation5 + $0x238] sm:$0xff]
    %v145 = vld [vmem:[#allocation5 + $0x240] sm:$0xff]
    %v146 = vld [vmem:[#allocation5 + $0x248] sm:$0xff]
    %v147 = vld [vmem:[#allocation5 + $0x250] sm:$0xff]
    %v148 = vld [vmem:[#allocation5 + $0x258] sm:$0xff]
    %v149 = vld [vmem:[#allocation5 + $0x260] sm:$0xff]
    %v150 = vld [vmem:[#allocation5 + $0x268] sm:$0xff]
    %v151 = vld [vmem:[#allocation5 + $0x270] sm:$0xff]
    %v152 = vld [vmem:[#allocation5 + $0x278] sm:$0xff]
    %v153 = vld [vmem:[#allocation5 + $0x280] sm:$0xff]
    %v154 = vld [vmem:[#allocation5 + $0x288] sm:$0xff]
    %v155 = vld [vmem:[#allocation5 + $0x290] sm:$0xff]
    %v156 = vld [vmem:[#allocation5 + $0x298] sm:$0xff]
    %v157 = vld [vmem:[#allocation5 + $0x2a0] sm:$0xff]
    %v158 = vld [vmem:[#allocation5 + $0x2a8] sm:$0xff]
    %v159 = vld [vmem:[#allocation5 + $0x2b0] sm:$0xff]
    %v160 = vld [vmem:[#allocation5 + $0x2b8] sm:$0xff]
    %v161 = vld [vmem:[#allocation5 + $0x2c0] sm:$0xff]
    %v162 = vld [vmem:[#allocation5 + $0x2c8] sm:$0xff]
    %v163 = vld [vmem:[#allocation5 + $0x2d0] sm:$0xff]
    %v164 = vld [vmem:[#allocation5 + $0x2d8] sm:$0xff]
    %v165 = vld [vmem:[#allocation5 + $0x2e0] sm:$0xff]
    %v166 = vld [vmem:[#allocation5 + $0x2e8] sm:$0xff]
    %v167 = vld [vmem:[#allocation5 + $0x2f0] sm:$0xff]
    %v168 = vld [vmem:[#allocation5 + $0x2f8] sm:$0xff]
    %v169 = vld [vmem:[#allocation5 + $0x300] sm:$0xff]
    %v170 = vld [vmem:[#allocation5 + $0x308] sm:$0xff]
    %v171 = vld [vmem:[#allocation5 + $0x310] sm:$0xff]
    %v172 = vld [vmem:[#allocation5 + $0x318] sm:$0xff]
    %v173 = vld [vmem:[#allocation5 + $0x320] sm:$0xff]
    %v174 = vld [vmem:[#allocation5 + $0x328] sm:$0xff]
    %v175 = vld [vmem:[#allocation5 + $0x330] sm:$0xff]
    %v176 = vld [vmem:[#allocation5 + $0x338] sm:$0xff]
    %v177 = vld [vmem:[#allocation5 + $0x340] sm:$0xff]
    %v178 = vld [vmem:[#allocation5 + $0x348] sm:$0xff]
    %v179 = vld [vmem:[#allocation5 + $0x350] sm:$0xff]
    %v180 = vld [vmem:[#allocation5 + $0x358] sm:$0xff]
    %v181 = vld [vmem:[#allocation5 + $0x360] sm:$0xff]
    %v182 = vld [vmem:[#allocation5 + $0x368] sm:$0xff]
    %v183 = vld [vmem:[#allocation5 + $0x370] sm:$0xff]
    %v184 = vld [vmem:[#allocation5 + $0x378] sm:$0xff]
    %v185 = vld [vmem:[#allocation5 + $0x380] sm:$0xff]
    %v186 = vld [vmem:[#allocation5 + $0x388] sm:$0xff]
    %v187 = vld [vmem:[#allocation5 + $0x390] sm:$0xff]
    %v188 = vld [vmem:[#allocation5 + $0x398] sm:$0xff]
    %v189 = vld [vmem:[#allocation5 + $0x3a0] sm:$0xff]
    %v190 = vld [vmem:[#allocation5 + $0x3a8] sm:$0xff]
    %v191 = vld [vmem:[#allocation5 + $0x3b0] sm:$0xff]
    %v192 = vld [vmem:[#allocation5 + $0x3b8] sm:$0xff]
    %v193 = vld [vmem:[#allocation5 + $0x3c0] sm:$0xff]
    %v194 = vld [vmem:[#allocation5 + $0x3c8] sm:$0xff]
    %v195 = vld [vmem:[#allocation5 + $0x3d0] sm:$0xff]
    %v196 = vld [vmem:[#allocation5 + $0x3d8] sm:$0xff]
    %v197 = vld [vmem:[#allocation5 + $0x3e0] sm:$0xff]
    %v198 = vld [vmem:[#allocation5 + $0x3e8] sm:$0xff]
    %v199 = vld [vmem:[#allocation5 + $0x3f0] sm:$0xff]
    %v200 = vld [vmem:[#allocation5 + $0x3f8] sm:$0xff]
    %v201 = vld [vmem:[#allocation5 + $0x400] sm:$0xff]
    %v202 = vld [vmem:[#allocation5 + $0x408] sm:$0xff]
    %v203 = vld [vmem:[#allocation5 + $0x410] sm:$0xff]
    %v204 = vld [vmem:[#allocation5 + $0x418] sm:$0xff]
    %v205 = vld [vmem:[#allocation5 + $0x420] sm:$0xff]
    %v206 = vld [vmem:[#allocation5 + $0x428] sm:$0xff]
    %v207 = vld [vmem:[#allocation5 + $0x430] sm:$0xff]
    %v208 = vld [vmem:[#allocation5 + $0x438] sm:$0xff]
    %v209 = vld [vmem:[#allocation5 + $0x440] sm:$0xff]
    %v210 = vld [vmem:[#allocation5 + $0x448] sm:$0xff]
    %v211 = vld [vmem:[#allocation5 + $0x450] sm:$0xff]
    %v212 = vld [vmem:[#allocation5 + $0x458] sm:$0xff]
    %v213 = vld [vmem:[#allocation5 + $0x460] sm:$0xff]
    %v214 = vld [vmem:[#allocation5 + $0x468] sm:$0xff]
    %v215 = vld [vmem:[#allocation5 + $0x470] sm:$0xff]
    %v216 = vld [vmem:[#allocation5 + $0x478] sm:$0xff]
    %v217 = vld [vmem:[#allocation5 + $0x480] sm:$0xff]
    %v218 = vld [vmem:[#allocation5 + $0x488] sm:$0xff]
    %v219 = vld [vmem:[#allocation5 + $0x490] sm:$0xff]
    %v220 = vld [vmem:[#allocation5 + $0x498] sm:$0xff]
    %v221 = vld [vmem:[#allocation5 + $0x4a0] sm:$0xff]
    %v222 = vld [vmem:[#allocation5 + $0x4a8] sm:$0xff]
    %v223 = vld [vmem:[#allocation5 + $0x4b0] sm:$0xff]
    %v224 = vld [vmem:[#allocation5 + $0x4b8] sm:$0xff]
    %v225 = vld [vmem:[#allocation5 + $0x4c0] sm:$0xff]
    %v226 = vld [vmem:[#allocation5 + $0x4c8] sm:$0xff]
    %v227 = vld [vmem:[#allocation5 + $0x4d0] sm:$0xff]
    %v228 = vld [vmem:[#allocation5 + $0x4d8] sm:$0xff]
    %v229 = vld [vmem:[#allocation5 + $0x4e0] sm:$0xff]
    %v230 = vld [vmem:[#allocation5 + $0x4e8] sm:$0xff]
    %v231 = vld [vmem:[#allocation5 + $0x4f0] sm:$0xff]
    %v232 = vld [vmem:[#allocation5 + $0x4f8] sm:$0xff]
    %v233 = vld [vmem:[#allocation5 + $0x500] sm:$0xff]
    %v234 = vld [vmem:[#allocation5 + $0x508] sm:$0xff]
    %v235 = vld [vmem:[#allocation5 + $0x510] sm:$0xff]
    %v236 = vld [vmem:[#allocation5 + $0x518] sm:$0xff]
    %v237 = vld [vmem:[#allocation5 + $0x520] sm:$0xff]
    %v238 = vld [vmem:[#allocation5 + $0x528] sm:$0xff]
    %v239 = vld [vmem:[#allocation5 + $0x530] sm:$0xff]
    %v240 = vld [vmem:[#allocation5 + $0x538] sm:$0xff]
    %v241 = vld [vmem:[#allocation5 + $0x540] sm:$0xff]
    %v242 = vld [vmem:[#allocation5 + $0x548] sm:$0xff]
    %v243 = vld [vmem:[#allocation5 + $0x550] sm:$0xff]
    %v244 = vld [vmem:[#allocation5 + $0x558] sm:$0xff]
    %v245 = vld [vmem:[#allocation5 + $0x560] sm:$0xff]
    %v246 = vld [vmem:[#allocation5 + $0x568] sm:$0xff]
    %v247 = vld [vmem:[#allocation5 + $0x570] sm:$0xff]
    %v248 = vld [vmem:[#allocation5 + $0x578] sm:$0xff]
    %v249 = vld [vmem:[#allocation5 + $0x580] sm:$0xff]
    %v250 = vld [vmem:[#allocation5 + $0x588] sm:$0xff]
    %v251 = vld [vmem:[#allocation5 + $0x590] sm:$0xff]
    %v252 = vld [vmem:[#allocation5 + $0x598] sm:$0xff]
    %v253 = vld [vmem:[#allocation5 + $0x5a0] sm:$0xff]
    %v254 = vld [vmem:[#allocation5 + $0x5a8] sm:$0xff]
    %v255 = vld [vmem:[#allocation5 + $0x5b0] sm:$0xff]
    %v256 = vld [vmem:[#allocation5 + $0x5b8] sm:$0xff]
    %v257 = vld [vmem:[#allocation5 + $0x5c0] sm:$0xff]
    %v258 = vld [vmem:[#allocation5 + $0x5c8] sm:$0xff]
    %v259 = vld [vmem:[#allocation5 + $0x5d0] sm:$0xff]
    %v260 = vld [vmem:[#allocation5 + $0x5d8] sm:$0xff]
    %v261 = vld [vmem:[#allocation5 + $0x5e0] sm:$0xff]
    %v262 = vld [vmem:[#allocation5 + $0x5e8] sm:$0xff]
    %v263 = vld [vmem:[#allocation5 + $0x5f0] sm:$0xff]
    %v264 = vld [vmem:[#allocation5 + $0x5f8] sm:$0xff]
    %v265 = vld [vmem:[#allocation5 + $0x600] sm:$0xff]
    %v266 = vld [vmem:[#allocation5 + $0x608] sm:$0xff]
    %v267 = vld [vmem:[#allocation5 + $0x610] sm:$0xff]
    %v268 = vld [vmem:[#allocation5 + $0x618] sm:$0xff]
    %v269 = vld [vmem:[#allocation5 + $0x620] sm:$0xff]
    %v270 = vld [vmem:[#allocation5 + $0x628] sm:$0xff]
    %v271 = vld [vmem:[#allocation5 + $0x630] sm:$0xff]
    %v272 = vld [vmem:[#allocation5 + $0x638] sm:$0xff]
    %v273 = vld [vmem:[#allocation5 + $0x640] sm:$0xff]
    %v274 = vld [vmem:[#allocation5 + $0x648] sm:$0xff]
    %v275 = vld [vmem:[#allocation5 + $0x650] sm:$0xff]
    %v276 = vld [vmem:[#allocation5 + $0x658] sm:$0xff]
    %v277 = vld [vmem:[#allocation5 + $0x660] sm:$0xff]
    %v278 = vld [vmem:[#allocation5 + $0x668] sm:$0xff]
    %v279 = vld [vmem:[#allocation5 + $0x670] sm:$0xff]
    %v280 = vld [vmem:[#allocation5 + $0x678] sm:$0xff]
    %v281 = vld [vmem:[#allocation5 + $0x680] sm:$0xff]
    %v282 = vld [vmem:[#allocation5 + $0x688] sm:$0xff]
    %v283 = vld [vmem:[#allocation5 + $0x690] sm:$0xff]
    %v284 = vld [vmem:[#allocation5 + $0x698] sm:$0xff]
    %v285 = vld [vmem:[#allocation5 + $0x6a0] sm:$0xff]
    %v286 = vld [vmem:[#allocation5 + $0x6a8] sm:$0xff]
    %v287 = vld [vmem:[#allocation5 + $0x6b0] sm:$0xff]
    %v288 = vld [vmem:[#allocation5 + $0x6b8] sm:$0xff]
    %v289 = vld [vmem:[#allocation5 + $0x6c0] sm:$0xff]
    %v290 = vld [vmem:[#allocation5 + $0x6c8] sm:$0xff]
    %v291 = vld [vmem:[#allocation5 + $0x6d0] sm:$0xff]
    %v292 = vld [vmem:[#allocation5 + $0x6d8] sm:$0xff]
    %v293 = vld [vmem:[#allocation5 + $0x6e0] sm:$0xff]
    %v294 = vld [vmem:[#allocation5 + $0x6e8] sm:$0xff]
    %v295 = vld [vmem:[#allocation5 + $0x6f0] sm:$0xff]
    %v296 = vld [vmem:[#allocation5 + $0x6f8] sm:$0xff]
    %v297 = vld [vmem:[#allocation5 + $0x700] sm:$0xff]
    %v298 = vld [vmem:[#allocation5 + $0x708] sm:$0xff]
    %v299 = vld [vmem:[#allocation5 + $0x710] sm:$0xff]
    %v300 = vld [vmem:[#allocation5 + $0x718] sm:$0xff]
    %v301 = vld [vmem:[#allocation5 + $0x720] sm:$0xff]
    %v302 = vld [vmem:[#allocation5 + $0x728] sm:$0xff]
    %v303 = vld [vmem:[#allocation5 + $0x730] sm:$0xff]
    %v304 = vld [vmem:[#allocation5 + $0x738] sm:$0xff]
    %v305 = vld [vmem:[#allocation5 + $0x740] sm:$0xff]
    %v306 = vld [vmem:[#allocation5 + $0x748] sm:$0xff]
    %v307 = vld [vmem:[#allocation5 + $0x750] sm:$0xff]
    %v308 = vld [vmem:[#allocation5 + $0x758] sm:$0xff]
    %v309 = vld [vmem:[#allocation5 + $0x760] sm:$0xff]
    %v310 = vld [vmem:[#allocation5 + $0x768] sm:$0xff]
    %v311 = vld [vmem:[#allocation5 + $0x770] sm:$0xff]
    %v312 = vld [vmem:[#allocation5 + $0x778] sm:$0xff]
    %v313 = vld [vmem:[#allocation5 + $0x780] sm:$0xff]
    %v314 = vld [vmem:[#allocation5 + $0x788] sm:$0xff]
    %v315 = vld [vmem:[#allocation5 + $0x790] sm:$0xff]
    %v316 = vld [vmem:[#allocation5 + $0x798] sm:$0xff]
    %v317 = vld [vmem:[#allocation5 + $0x7a0] sm:$0xff]
    %v318 = vld [vmem:[#allocation5 + $0x7a8] sm:$0xff]
    %v319 = vld [vmem:[#allocation5 + $0x7b0] sm:$0xff]
    %v320 = vld [vmem:[#allocation5 + $0x7b8] sm:$0xff]
    %v321 = vld [vmem:[#allocation5 + $0x7c0] sm:$0xff]
    %v322 = vld [vmem:[#allocation5 + $0x7c8] sm:$0xff]
    %v323 = vld [vmem:[#allocation5 + $0x7d0] sm:$0xff]
    %v324 = vld [vmem:[#allocation5 + $0x7d8] sm:$0xff]
    %v325 = vld [vmem:[#allocation5 + $0x7e0] sm:$0xff]
    %v326 = vld [vmem:[#allocation5 + $0x7e8] sm:$0xff]
    %v327 = vld [vmem:[#allocation5 + $0x7f0] sm:$0xff]
    %v328 = vld [vmem:[#allocation5 + $0x7f8] sm:$0xff]
    %v329 = vld [vmem:[#allocation5 + $0x800] sm:$0xff]
    %v330 = vld [vmem:[#allocation5 + $0x808] sm:$0xff]
    %v331 = vld [vmem:[#allocation5 + $0x810] sm:$0xff]
    %v332 = vld [vmem:[#allocation5 + $0x818] sm:$0xff]
    %v333 = vld [vmem:[#allocation5 + $0x820] sm:$0xff]
    %v334 = vld [vmem:[#allocation5 + $0x828] sm:$0xff]
    %v335 = vld [vmem:[#allocation5 + $0x830] sm:$0xff]
    %v336 = vld [vmem:[#allocation5 + $0x838] sm:$0xff]
    %v337 = vld [vmem:[#allocation5 + $0x840] sm:$0xff]
    %v338 = vld [vmem:[#allocation5 + $0x848] sm:$0xff]
    %v339 = vld [vmem:[#allocation5 + $0x850] sm:$0xff]
    %v340 = vld [vmem:[#allocation5 + $0x858] sm:$0xff]
    %v341 = vld [vmem:[#allocation5 + $0x860] sm:$0xff]
    %v342 = vld [vmem:[#allocation5 + $0x868] sm:$0xff]
    %v343 = vld [vmem:[#allocation5 + $0x870] sm:$0xff]
    %v344 = vld [vmem:[#allocation5 + $0x878] sm:$0xff]
    %v345 = vld [vmem:[#allocation5 + $0x880] sm:$0xff]
    %v346 = vld [vmem:[#allocation5 + $0x888] sm:$0xff]
    %v347 = vld [vmem:[#allocation5 + $0x890] sm:$0xff]
    %v348 = vld [vmem:[#allocation5 + $0x898] sm:$0xff]
    %v349 = vld [vmem:[#allocation5 + $0x8a0] sm:$0xff]
    %v350 = vld [vmem:[#allocation5 + $0x8a8] sm:$0xff]
    %v351 = vld [vmem:[#allocation5 + $0x8b0] sm:$0xff]
    %v352 = vld [vmem:[#allocation5 + $0x8b8] sm:$0xff]
    %v353 = vld [vmem:[#allocation5 + $0x8c0] sm:$0xff]
    %v354 = vld [vmem:[#allocation5 + $0x8c8] sm:$0xff]
    %v355 = vld [vmem:[#allocation5 + $0x8d0] sm:$0xff]
    %v356 = vld [vmem:[#allocation5 + $0x8d8] sm:$0xff]
    %v357 = vld [vmem:[#allocation5 + $0x8e0] sm:$0xff]
    %v358 = vld [vmem:[#allocation5 + $0x8e8] sm:$0xff]
    %v359 = vld [vmem:[#allocation5 + $0x8f0] sm:$0xff]
    %v360 = vld [vmem:[#allocation5 + $0x8f8] sm:$0xff]
    %v361 = vld [vmem:[#allocation5 + $0x900] sm:$0xff]
    %v362 = vld [vmem:[#allocation5 + $0x908] sm:$0xff]
    %v363 = vld [vmem:[#allocation5 + $0x910] sm:$0xff]
    %v364 = vld [vmem:[#allocation5 + $0x918] sm:$0xff]
    %v365 = vld [vmem:[#allocation5 + $0x920] sm:$0xff]
    %v366 = vld [vmem:[#allocation5 + $0x928] sm:$0xff]
    %v367 = vld [vmem:[#allocation5 + $0x930] sm:$0xff]
    %v368 = vld [vmem:[#allocation5 + $0x938] sm:$0xff]
    %v369 = vld [vmem:[#allocation5 + $0x940] sm:$0xff]
    %v370 = vld [vmem:[#allocation5 + $0x948] sm:$0xff]
    %v371 = vld [vmem:[#allocation5 + $0x950] sm:$0xff]
    %v372 = vld [vmem:[#allocation5 + $0x958] sm:$0xff]
    %v373 = vld [vmem:[#allocation5 + $0x960] sm:$0xff]
    %v374 = vld [vmem:[#allocation5 + $0x968] sm:$0xff]
    %v375 = vld [vmem:[#allocation5 + $0x970] sm:$0xff]
    %v376 = vld [vmem:[#allocation5 + $0x978] sm:$0xff]
    %v377 = vld [vmem:[#allocation5 + $0x980] sm:$0xff]
    %v378 = vld [vmem:[#allocation5 + $0x988] sm:$0xff]
    %v379 = vld [vmem:[#allocation5 + $0x990] sm:$0xff]
    %v380 = vld [vmem:[#allocation5 + $0x998] sm:$0xff]
    %v381 = vld [vmem:[#allocation5 + $0x9a0] sm:$0xff]
    %v382 = vld [vmem:[#allocation5 + $0x9a8] sm:$0xff]
    %v383 = vld [vmem:[#allocation5 + $0x9b0] sm:$0xff]
    %v384 = vld [vmem:[#allocation5 + $0x9b8] sm:$0xff]
    %v385 = vld [vmem:[#allocation5 + $0x9c0] sm:$0xff]
    %v386 = vld [vmem:[#allocation5 + $0x9c8] sm:$0xff]
    %v387 = vld [vmem:[#allocation5 + $0x9d0] sm:$0xff]
    %v388 = vld [vmem:[#allocation5 + $0x9d8] sm:$0xff]
    %v389 = vld [vmem:[#allocation5 + $0x9e0] sm:$0xff]
    %v390 = vld [vmem:[#allocation5 + $0x9e8] sm:$0xff]
    %v391 = vld [vmem:[#allocation5 + $0x9f0] sm:$0xff]
    %v392 = vld [vmem:[#allocation5 + $0x9f8] sm:$0xff]
    %v393 = vld [vmem:[#allocation5 + $0xa00] sm:$0xff]
    %v394 = vld [vmem:[#allocation5 + $0xa08] sm:$0xff]
    %v395 = vld [vmem:[#allocation5 + $0xa10] sm:$0xff]
    %v396 = vld [vmem:[#allocation5 + $0xa18] sm:$0xff]
    %v397 = vld [vmem:[#allocation5 + $0xa20] sm:$0xff]
    %v398 = vld [vmem:[#allocation5 + $0xa28] sm:$0xff]
    %v399 = vld [vmem:[#allocation5 + $0xa30] sm:$0xff]
    %v400 = vld [vmem:[#allocation5 + $0xa38] sm:$0xff]
    %v401 = vld [vmem:[#allocation5 + $0xa40] sm:$0xff]
    %v402 = vld [vmem:[#allocation5 + $0xa48] sm:$0xff]
    %v403 = vld [vmem:[#allocation5 + $0xa50] sm:$0xff]
    %v404 = vld [vmem:[#allocation5 + $0xa58] sm:$0xff]
    %v405 = vld [vmem:[#allocation5 + $0xa60] sm:$0xff]
    %v406 = vld [vmem:[#allocation5 + $0xa68] sm:$0xff]
    %v407 = vld [vmem:[#allocation5 + $0xa70] sm:$0xff]
    %v408 = vld [vmem:[#allocation5 + $0xa78] sm:$0xff]
    %v409 = vld [vmem:[#allocation5 + $0xa80] sm:$0xff]
    %v410 = vld [vmem:[#allocation5 + $0xa88] sm:$0xff]
    %v411 = vld [vmem:[#allocation5 + $0xa90] sm:$0xff]
    %v412 = vld [vmem:[#allocation5 + $0xa98] sm:$0xff]
    %v413 = vld [vmem:[#allocation5 + $0xaa0] sm:$0xff]
    %v414 = vld [vmem:[#allocation5 + $0xaa8] sm:$0xff]
    %v415 = vld [vmem:[#allocation5 + $0xab0] sm:$0xff]
    %v416 = vld [vmem:[#allocation5 + $0xab8] sm:$0xff]
    %v417 = vld [vmem:[#allocation5 + $0xac0] sm:$0xff]
    %v418 = vld [vmem:[#allocation5 + $0xac8] sm:$0xff]
    %v419 = vld [vmem:[#allocation5 + $0xad0] sm:$0xff]
    %v420 = vld [vmem:[#allocation5 + $0xad8] sm:$0xff]
    %v421 = vld [vmem:[#allocation5 + $0xae0] sm:$0xff]
    %v422 = vld [vmem:[#allocation5 + $0xae8] sm:$0xff]
    %v423 = vld [vmem:[#allocation5 + $0xaf0] sm:$0xff]
    %v424 = vld [vmem:[#allocation5 + $0xaf8] sm:$0xff]
    %v425 = vld [vmem:[#allocation5 + $0xb00] sm:$0xff]
    %v426 = vld [vmem:[#allocation5 + $0xb08] sm:$0xff]
    %v427 = vld [vmem:[#allocation5 + $0xb10] sm:$0xff]
    %v428 = vld [vmem:[#allocation5 + $0xb18] sm:$0xff]
    %v429 = vld [vmem:[#allocation5 + $0xb20] sm:$0xff]
    %v430 = vld [vmem:[#allocation5 + $0xb28] sm:$0xff]
    %v431 = vld [vmem:[#allocation5 + $0xb30] sm:$0xff]
    %v432 = vld [vmem:[#allocation5 + $0xb38] sm:$0xff]
    %v433 = vld [vmem:[#allocation5 + $0xb40] sm:$0xff]
    %v434 = vld [vmem:[#allocation5 + $0xb48] sm:$0xff]
    %v435 = vld [vmem:[#allocation5 + $0xb50] sm:$0xff]
    %v436 = vld [vmem:[#allocation5 + $0xb58] sm:$0xff]
    %v437 = vld [vmem:[#allocation5 + $0xb60] sm:$0xff]
    %v438 = vld [vmem:[#allocation5 + $0xb68] sm:$0xff]
    %v439 = vld [vmem:[#allocation5 + $0xb70] sm:$0xff]
    %v440 = vld [vmem:[#allocation5 + $0xb78] sm:$0xff]
    %v441 = vld [vmem:[#allocation5 + $0xb80] sm:$0xff]
    %v442 = vld [vmem:[#allocation5 + $0xb88] sm:$0xff]
    %v443 = vld [vmem:[#allocation5 + $0xb90] sm:$0xff]
    %v444 = vld [vmem:[#allocation5 + $0xb98] sm:$0xff]
    %v445 = vld [vmem:[#allocation5 + $0xba0] sm:$0xff]
    %v446 = vld [vmem:[#allocation5 + $0xba8] sm:$0xff]
    %v447 = vld [vmem:[#allocation5 + $0xbb0] sm:$0xff]
    %v448 = vld [vmem:[#allocation5 + $0xbb8] sm:$0xff]
    %v449 = vld [vmem:[#allocation5 + $0xbc0] sm:$0xff]
    %v450 = vld [vmem:[#allocation5 + $0xbc8] sm:$0xff]
    %v451 = vld [vmem:[#allocation5 + $0xbd0] sm:$0xff]
    %v452 = vld [vmem:[#allocation5 + $0xbd8] sm:$0xff]
    %v453 = vld [vmem:[#allocation5 + $0xbe0] sm:$0xff]
    %v454 = vld [vmem:[#allocation5 + $0xbe8] sm:$0xff]
    %v455 = vld [vmem:[#allocation5 + $0xbf0] sm:$0xff]
    %v456 = vld [vmem:[#allocation5 + $0xbf8] sm:$0xff]
    %v457 = vld [vmem:[#allocation5 + $0xc00] sm:$0xff]
    %v458 = vld [vmem:[#allocation5 + $0xc08] sm:$0xff]
    %v459 = vld [vmem:[#allocation5 + $0xc10] sm:$0xff]
    %v460 = vld [vmem:[#allocation5 + $0xc18] sm:$0xff]
    %v461 = vld [vmem:[#allocation5 + $0xc20] sm:$0xff]
    %v462 = vld [vmem:[#allocation5 + $0xc28] sm:$0xff]
    %v463 = vld [vmem:[#allocation5 + $0xc30] sm:$0xff]
    %v464 = vld [vmem:[#allocation5 + $0xc38] sm:$0xff]
    %v465 = vld [vmem:[#allocation5 + $0xc40] sm:$0xff]
    %v466 = vld [vmem:[#allocation5 + $0xc48] sm:$0xff]
    %v467 = vld [vmem:[#allocation5 + $0xc50] sm:$0xff]
    %v468 = vld [vmem:[#allocation5 + $0xc58] sm:$0xff]
    %v469 = vld [vmem:[#allocation5 + $0xc60] sm:$0xff]
    %v470 = vld [vmem:[#allocation5 + $0xc68] sm:$0xff]
    %v471 = vld [vmem:[#allocation5 + $0xc70] sm:$0xff]
    %v472 = vld [vmem:[#allocation5 + $0xc78] sm:$0xff]
    %v473 = vld [vmem:[#allocation5 + $0xc80] sm:$0xff]
    %v474 = vld [vmem:[#allocation5 + $0xc88] sm:$0xff]
    %v475 = vld [vmem:[#allocation5 + $0xc90] sm:$0xff]
    %v476 = vld [vmem:[#allocation5 + $0xc98] sm:$0xff]
    %v477 = vld [vmem:[#allocation5 + $0xca0] sm:$0xff]
    %v478 = vld [vmem:[#allocation5 + $0xca8] sm:$0xff]
    %v479 = vld [vmem:[#allocation5 + $0xcb0] sm:$0xff]
    %v480 = vld [vmem:[#allocation5 + $0xcb8] sm:$0xff]
    %v481 = vld [vmem:[#allocation5 + $0xcc0] sm:$0xff]
    %v482 = vld [vmem:[#allocation5 + $0xcc8] sm:$0xff]
    %v483 = vld [vmem:[#allocation5 + $0xcd0] sm:$0xff]
    %v484 = vld [vmem:[#allocation5 + $0xcd8] sm:$0xff]
    %v485 = vld [vmem:[#allocation5 + $0xce0] sm:$0xff]
    %v486 = vld [vmem:[#allocation5 + $0xce8] sm:$0xff]
    %v487 = vld [vmem:[#allocation5 + $0xcf0] sm:$0xff]
    %v488 = vld [vmem:[#allocation5 + $0xcf8] sm:$0xff]
    %v489 = vld [vmem:[#allocation5 + $0xd00] sm:$0xff]
    %v490 = vld [vmem:[#allocation5 + $0xd08] sm:$0xff]
    %v491 = vld [vmem:[#allocation5 + $0xd10] sm:$0xff]
    %v492 = vld [vmem:[#allocation5 + $0xd18] sm:$0xff]
    %v493 = vld [vmem:[#allocation5 + $0xd20] sm:$0xff]
    %v494 = vld [vmem:[#allocation5 + $0xd28] sm:$0xff]
    %v495 = vld [vmem:[#allocation5 + $0xd30] sm:$0xff]
    %v496 = vld [vmem:[#allocation5 + $0xd38] sm:$0xff]
    %v497 = vld [vmem:[#allocation5 + $0xd40] sm:$0xff]
    %v498 = vld [vmem:[#allocation5 + $0xd48] sm:$0xff]
    %v499 = vld [vmem:[#allocation5 + $0xd50] sm:$0xff]
    %v500 = vld [vmem:[#allocation5 + $0xd58] sm:$0xff]
    %v501 = vld [vmem:[#allocation5 + $0xd60] sm:$0xff]
    %v502 = vld [vmem:[#allocation5 + $0xd68] sm:$0xff]
    %v503 = vld [vmem:[#allocation5 + $0xd70] sm:$0xff]
    %v504 = vld [vmem:[#allocation5 + $0xd78] sm:$0xff]
    %v505 = vld [vmem:[#allocation5 + $0xd80] sm:$0xff]
    %v506 = vld [vmem:[#allocation5 + $0xd88] sm:$0xff]
    %v507 = vld [vmem:[#allocation5 + $0xd90] sm:$0xff]
    %v508 = vld [vmem:[#allocation5 + $0xd98] sm:$0xff]
    %v509 = vld [vmem:[#allocation5 + $0xda0] sm:$0xff]
    %v510 = vld [vmem:[#allocation5 + $0xda8] sm:$0xff]
    %v511 = vld [vmem:[#allocation5 + $0xdb0] sm:$0xff]
    %v512 = vld [vmem:[#allocation5 + $0xdb8] sm:$0xff]
    %v513 = vld [vmem:[#allocation5 + $0xdc0] sm:$0xff]
    %v514 = vld [vmem:[#allocation5 + $0xdc8] sm:$0xff]
    %v515 = vld [vmem:[#allocation5 + $0xdd0] sm:$0xff]
    %v516 = vld [vmem:[#allocation5 + $0xdd8] sm:$0xff]
    %v517 = vld [vmem:[#allocation5 + $0xde0] sm:$0xff]
    %v518 = vld [vmem:[#allocation5 + $0xde8] sm:$0xff]
    %v519 = vld [vmem:[#allocation5 + $0xdf0] sm:$0xff]
    %v520 = vld [vmem:[#allocation5 + $0xdf8] sm:$0xff]
    %v521 = vld [vmem:[#allocation5 + $0xe00] sm:$0xff]
    %v522 = vld [vmem:[#allocation5 + $0xe08] sm:$0xff]
    %v523 = vld [vmem:[#allocation5 + $0xe10] sm:$0xff]
    %v524 = vld [vmem:[#allocation5 + $0xe18] sm:$0xff]
    %v525 = vld [vmem:[#allocation5 + $0xe20] sm:$0xff]
    %v526 = vld [vmem:[#allocation5 + $0xe28] sm:$0xff]
    %v527 = vld [vmem:[#allocation5 + $0xe30] sm:$0xff]
    %v528 = vld [vmem:[#allocation5 + $0xe38] sm:$0xff]
    %v529 = vld [vmem:[#allocation5 + $0xe40] sm:$0xff]
    %v530 = vld [vmem:[#allocation5 + $0xe48] sm:$0xff]
    %v531 = vld [vmem:[#allocation5 + $0xe50] sm:$0xff]
    %v532 = vld [vmem:[#allocation5 + $0xe58] sm:$0xff]
    %v533 = vld [vmem:[#allocation5 + $0xe60] sm:$0xff]
    %v534 = vld [vmem:[#allocation5 + $0xe68] sm:$0xff]
    %v535 = vld [vmem:[#allocation5 + $0xe70] sm:$0xff]
    %v536 = vld [vmem:[#allocation5 + $0xe78] sm:$0xff]
    %v537 = vld [vmem:[#allocation5 + $0xe80] sm:$0xff]
    %v538 = vld [vmem:[#allocation5 + $0xe88] sm:$0xff]
    %v539 = vld [vmem:[#allocation5 + $0xe90] sm:$0xff]
    %v540 = vld [vmem:[#allocation5 + $0xe98] sm:$0xff]
    %v541 = vld [vmem:[#allocation5 + $0xea0] sm:$0xff]
    %v542 = vld [vmem:[#allocation5 + $0xea8] sm:$0xff]
    %v543 = vld [vmem:[#allocation5 + $0xeb0] sm:$0xff]
    %v544 = vld [vmem:[#allocation5 + $0xeb8] sm:$0xff]
    %v545 = vld [vmem:[#allocation5 + $0xec0] sm:$0xff]
    %v546 = vld [vmem:[#allocation5 + $0xec8] sm:$0xff]
    %v547 = vld [vmem:[#allocation5 + $0xed0] sm:$0xff]
    %v548 = vld [vmem:[#allocation5 + $0xed8] sm:$0xff]
    %v549 = vld [vmem:[#allocation5 + $0xee0] sm:$0xff]
    %v550 = vld [vmem:[#allocation5 + $0xee8] sm:$0xff]
    %v551 = vld [vmem:[#allocation5 + $0xef0] sm:$0xff]
    %v552 = vld [vmem:[#allocation5 + $0xef8] sm:$0xff]
    %v553 = vld [vmem:[#allocation5 + $0xf00] sm:$0xff]
    %v554 = vld [vmem:[#allocation5 + $0xf08] sm:$0xff]
    %v555 = vld [vmem:[#allocation5 + $0xf10] sm:$0xff]
    %v556 = vld [vmem:[#allocation5 + $0xf18] sm:$0xff]
    %v557 = vld [vmem:[#allocation5 + $0xf20] sm:$0xff]
    %v558 = vld [vmem:[#allocation5 + $0xf28] sm:$0xff]
    %v559 = vld [vmem:[#allocation5 + $0xf30] sm:$0xff]
    %v560 = vld [vmem:[#allocation5 + $0xf38] sm:$0xff]
    %v561 = vld [vmem:[#allocation5 + $0xf40] sm:$0xff]
    %v562 = vld [vmem:[#allocation5 + $0xf48] sm:$0xff]
    %v563 = vld [vmem:[#allocation5 + $0xf50] sm:$0xff]
    %v564 = vld [vmem:[#allocation5 + $0xf58] sm:$0xff]
    %v565 = vld [vmem:[#allocation5 + $0xf60] sm:$0xff]
    %v566 = vld [vmem:[#allocation5 + $0xf68] sm:$0xff]
    %v567 = vld [vmem:[#allocation5 + $0xf70] sm:$0xff]
    %v568 = vld [vmem:[#allocation5 + $0xf78] sm:$0xff]
    %v569 = vld [vmem:[#allocation5 + $0xf80] sm:$0xff]
    %v570 = vld [vmem:[#allocation5 + $0xf88] sm:$0xff]
    %v571 = vld [vmem:[#allocation5 + $0xf90] sm:$0xff]
    %v572 = vld [vmem:[#allocation5 + $0xf98] sm:$0xff]
    %v573 = vld [vmem:[#allocation5 + $0xfa0] sm:$0xff]
    %v574 = vld [vmem:[#allocation5 + $0xfa8] sm:$0xff]
    %v575 = vld [vmem:[#allocation5 + $0xfb0] sm:$0xff]
    %v576 = vld [vmem:[#allocation5 + $0xfb8] sm:$0xff]
    %v577 = vld [vmem:[#allocation5 + $0xfc0] sm:$0xff]
    %v578 = vld [vmem:[#allocation5 + $0xfc8] sm:$0xff]
    %v579 = vld [vmem:[#allocation5 + $0xfd0] sm:$0xff]
    %v580 = vld [vmem:[#allocation5 + $0xfd8] sm:$0xff]
    %v581 = vld [vmem:[#allocation5 + $0xfe0] sm:$0xff]
    %v582 = vld [vmem:[#allocation5 + $0xfe8] sm:$0xff]
    %v583 = vld [vmem:[#allocation5 + $0xff0] sm:$0xff]
    %v584 = vld [vmem:[#allocation5 + $0xff8] sm:$0xff]
    %v585 = vld [vmem:[#allocation7] sm:$0xf]
    %v587 = vlaneseq
    %v588 = vshrl.u32 %v587, 7
    %v589 = vsub.s32 0, %v588
    %v590 = vrot.slane %v585, %v589
    %v591 = vlaneseq
    %v592 = vshrl.u32 %v591, 7
    %v593 = vsub.s32 1, %v592
    %v594 = vrot.slane %v585, %v593
    %v595 = vlaneseq
    %v596 = vshrl.u32 %v595, 7
    %v597 = vsub.s32 2, %v596
    %v598 = vrot.slane %v585, %v597
    %v599 = vlaneseq
    %v600 = vshrl.u32 %v599, 7
    %v601 = vsub.s32 3, %v600
    %v602 = vrot.slane %v585, %v601
    %v609 = vcombine.high %v71, %v71
    %v611 = vunpack.c.l.s4 1983009808
    %v612 = vunpack.c.0.s8 %v611
    %v613 = vlaneseq
    %v614 = vshrl.u32 %v613, 7
    %v615 = vsub.s32 %v612, %v614
    %v616 = vrot.slane %v71, %v615
    %v618 = vunpack.c.l.s4 1983009808
    %v619 = vunpack.c.0.s8 %v618
    %v620 = vlaneseq
    %v621 = vshrl.u32 %v620, 7
    %v622 = vsub.s32 %v619, %v621
    %v623 = vrot.slane %v609, %v622
    %v624 = vcombine.high %v616, %v616
    %v625 = vcombine.high %v623, %v623
    %v626 = vcombine.high %v72, %v72
    %v628 = vunpack.c.l.s4 1983009808
    %v629 = vunpack.c.0.s8 %v628
    %v630 = vlaneseq
    %v631 = vshrl.u32 %v630, 7
    %v632 = vsub.s32 %v629, %v631
    %v633 = vrot.slane %v72, %v632
    %v635 = vunpack.c.l.s4 1983009808
    %v636 = vunpack.c.0.s8 %v635
    %v637 = vlaneseq
    %v638 = vshrl.u32 %v637, 7
    %v639 = vsub.s32 %v636, %v638
    %v640 = vrot.slane %v626, %v639
    %v641 = vcombine.high %v633, %v633
    %v642 = vcombine.high %v640, %v640
    %651 = vmatprep.subr.mxu0 %v74
    %652 = vmatpush1.msra.mxu0 %v73
    %653 = vmatprep.subr.mxu0 %v78
    %654 = vmatpush1.msra.mxu0 %v77
    %655 = vmatprep.subr.mxu0 %v82
    %656 = vmatpush1.msra.mxu0 %v81
    %657 = vmatprep.subr.mxu0 %v86
    %658 = vmatpush1.msra.mxu0 %v85
    %659 = vmatprep.subr.mxu0 %v90
    %660 = vmatpush1.msra.mxu0 %v89
    %661 = vmatprep.subr.mxu0 %v94
    %662 = vmatpush1.msra.mxu0 %v93
    %663 = vmatprep.subr.mxu0 %v98
    %664 = vmatpush1.msra.mxu0 %v97
    %665 = vmatprep.subr.mxu0 %v102
    %666 = vmatpush1.msra.mxu0 %v101
    %667 = vmatprep.subr.mxu0 %v106
    %668 = vmatpush1.msra.mxu0 %v105
    %669 = vmatprep.subr.mxu0 %v110
    %670 = vmatpush1.msra.mxu0 %v109
    %671 = vmatprep.subr.mxu0 %v114
    %672 = vmatpush1.msra.mxu0 %v113
    %673 = vmatprep.subr.mxu0 %v118
    %674 = vmatpush1.msra.mxu0 %v117
    %675 = vmatprep.subr.mxu0 %v122
    %676 = vmatpush1.msra.mxu0 %v121
    %677 = vmatprep.subr.mxu0 %v126
    %678 = vmatpush1.msra.mxu0 %v125
    %679 = vmatprep.subr.mxu0 %v130
    %680 = vmatpush1.msra.mxu0 %v129
    %681 = vmatprep.subr.mxu0 %v134
    %682 = vmatpush1.msra.mxu0 %v133
    %683 = vmatprep.subr.mxu0 %v138
    %684 = vmatpush1.msra.mxu0 %v137
    %685 = vmatprep.subr.mxu0 %v142
    %686 = vmatpush1.msra.mxu0 %v141
    %687 = vmatprep.subr.mxu0 %v146
    %688 = vmatpush1.msra.mxu0 %v145
    %689 = vmatprep.subr.mxu0 %v150
    %690 = vmatpush1.msra.mxu0 %v149
    %691 = vmatprep.subr.mxu0 %v154
    %692 = vmatpush1.msra.mxu0 %v153
    %693 = vmatprep.subr.mxu0 %v158
    %694 = vmatpush1.msra.mxu0 %v157
    %695 = vmatprep.subr.mxu0 %v162
    %696 = vmatpush1.msra.mxu0 %v161
    %697 = vmatprep.subr.mxu0 %v166
    %698 = vmatpush1.msra.mxu0 %v165
    %699 = vmatprep.subr.mxu0 %v170
    %700 = vmatpush1.msra.mxu0 %v169
    %701 = vmatprep.subr.mxu0 %v174
    %702 = vmatpush1.msra.mxu0 %v173
    %703 = vmatprep.subr.mxu0 %v178
    %704 = vmatpush1.msra.mxu0 %v177
    %705 = vmatprep.subr.mxu0 %v182
    %706 = vmatpush1.msra.mxu0 %v181
    %707 = vmatprep.subr.mxu0 %v186
    %708 = vmatpush1.msra.mxu0 %v185
    %709 = vmatprep.subr.mxu0 %v190
    %710 = vmatpush1.msra.mxu0 %v189
    %711 = vmatprep.subr.mxu0 %v194
    %712 = vmatpush1.msra.mxu0 %v193
    %713 = vmatprep.subr.mxu0 %v198
    %714 = vmatpush1.msra.mxu0 %v197
    %715 = vmatprep.mubr.f32.mxu0 %v624
    %716 = vmatmul.mubr.f32.gmra.mrb[0].mxu0 %v616
    %v717 = vpop.f32.mrb[0].mxu0
    %v718 = vadd.f32 %v590, %v717
    %v719 = vpop.f32.mrb[0].mxu0
    %v720 = vadd.f32 %v594, %v719
    %721 = vdwg.mxu0
    %722 = vmatprep.subr.mxu0 %v202
    %723 = vmatpush1.msra.mxu0 %v201
    %724 = vmatprep.subr.mxu0 %v206
    %725 = vmatpush1.msra.mxu0 %v205
    %726 = vmatprep.subr.mxu0 %v210
    %727 = vmatpush1.msra.mxu0 %v209
    %728 = vmatprep.subr.mxu0 %v214
    %729 = vmatpush1.msra.mxu0 %v213
    %730 = vmatprep.subr.mxu0 %v218
    %731 = vmatpush1.msra.mxu0 %v217
    %732 = vmatprep.subr.mxu0 %v222
    %733 = vmatpush1.msra.mxu0 %v221
    %734 = vmatprep.subr.mxu0 %v226
    %735 = vmatpush1.msra.mxu0 %v225
    %736 = vmatprep.subr.mxu0 %v230
    %737 = vmatpush1.msra.mxu0 %v229
    %738 = vmatprep.subr.mxu0 %v234
    %739 = vmatpush1.msra.mxu0 %v233
    %740 = vmatprep.subr.mxu0 %v238
    %741 = vmatpush1.msra.mxu0 %v237
    %742 = vmatprep.subr.mxu0 %v242
    %743 = vmatpush1.msra.mxu0 %v241
    %744 = vmatprep.subr.mxu0 %v246
    %745 = vmatpush1.msra.mxu0 %v245
    %746 = vmatprep.subr.mxu0 %v250
    %747 = vmatpush1.msra.mxu0 %v249
    %748 = vmatprep.subr.mxu0 %v254
    %749 = vmatpush1.msra.mxu0 %v253
    %750 = vmatprep.subr.mxu0 %v258
    %751 = vmatpush1.msra.mxu0 %v257
    %752 = vmatprep.subr.mxu0 %v262
    %753 = vmatpush1.msra.mxu0 %v261
    %754 = vmatprep.subr.mxu0 %v266
    %755 = vmatpush1.msra.mxu0 %v265
    %756 = vmatprep.subr.mxu0 %v270
    %757 = vmatpush1.msra.mxu0 %v269
    %758 = vmatprep.subr.mxu0 %v274
    %759 = vmatpush1.msra.mxu0 %v273
    %760 = vmatprep.subr.mxu0 %v278
    %761 = vmatpush1.msra.mxu0 %v277
    %762 = vmatprep.subr.mxu0 %v282
    %763 = vmatpush1.msra.mxu0 %v281
    %764 = vmatprep.subr.mxu0 %v286
    %765 = vmatpush1.msra.mxu0 %v285
    %766 = vmatprep.subr.mxu0 %v290
    %767 = vmatpush1.msra.mxu0 %v289
    %768 = vmatprep.subr.mxu0 %v294
    %769 = vmatpush1.msra.mxu0 %v293
    %770 = vmatprep.subr.mxu0 %v298
    %771 = vmatpush1.msra.mxu0 %v297
    %772 = vmatprep.subr.mxu0 %v302
    %773 = vmatpush1.msra.mxu0 %v301
    %774 = vmatprep.subr.mxu0 %v306
    %775 = vmatpush1.msra.mxu0 %v305
    %776 = vmatprep.subr.mxu0 %v310
    %777 = vmatpush1.msra.mxu0 %v309
    %778 = vmatprep.subr.mxu0 %v314
    %779 = vmatpush1.msra.mxu0 %v313
    %780 = vmatprep.subr.mxu0 %v318
    %781 = vmatpush1.msra.mxu0 %v317
    %782 = vmatprep.subr.mxu0 %v322
    %783 = vmatpush1.msra.mxu0 %v321
    %784 = vmatprep.subr.mxu0 %v326
    %785 = vmatpush1.msra.mxu0 %v325
    %786 = vmatprep.mubr.f32.mxu0 %v625
    %787 = vmatmul.mubr.f32.gmra.mrb[0].mxu0 %v623
    %v788 = vpop.f32.mrb[0].mxu0
    %v789 = vadd.f32 %v718, %v788
    %v790 = vpop.f32.mrb[0].mxu0
    %v791 = vadd.f32 %v720, %v790
    %792 = vdwg.mxu0
    %793 = vmatprep.subr.mxu0 %v330
    %794 = vmatpush1.msra.mxu0 %v329
    %795 = vmatprep.subr.mxu0 %v334
    %796 = vmatpush1.msra.mxu0 %v333
    %797 = vmatprep.subr.mxu0 %v338
    %798 = vmatpush1.msra.mxu0 %v337
    %799 = vmatprep.subr.mxu0 %v342
    %800 = vmatpush1.msra.mxu0 %v341
    %801 = vmatprep.subr.mxu0 %v346
    %802 = vmatpush1.msra.mxu0 %v345
    %803 = vmatprep.subr.mxu0 %v350
    %804 = vmatpush1.msra.mxu0 %v349
    %805 = vmatprep.subr.mxu0 %v354
    %806 = vmatpush1.msra.mxu0 %v353
    %807 = vmatprep.subr.mxu0 %v358
    %808 = vmatpush1.msra.mxu0 %v357
    %809 = vmatprep.subr.mxu0 %v362
    %810 = vmatpush1.msra.mxu0 %v361
    %811 = vmatprep.subr.mxu0 %v366
    %812 = vmatpush1.msra.mxu0 %v365
    %813 = vmatprep.subr.mxu0 %v370
    %814 = vmatpush1.msra.mxu0 %v369
    %815 = vmatprep.subr.mxu0 %v374
    %816 = vmatpush1.msra.mxu0 %v373
    %817 = vmatprep.subr.mxu0 %v378
    %818 = vmatpush1.msra.mxu0 %v377
    %819 = vmatprep.subr.mxu0 %v382
    %820 = vmatpush1.msra.mxu0 %v381
    %821 = vmatprep.subr.mxu0 %v386
    %822 = vmatpush1.msra.mxu0 %v385
    %823 = vmatprep.subr.mxu0 %v390
    %824 = vmatpush1.msra.mxu0 %v389
    %825 = vmatprep.subr.mxu0 %v394
    %826 = vmatpush1.msra.mxu0 %v393
    %827 = vmatprep.subr.mxu0 %v398
    %828 = vmatpush1.msra.mxu0 %v397
    %829 = vmatprep.subr.mxu0 %v402
    %830 = vmatpush1.msra.mxu0 %v401
    %831 = vmatprep.subr.mxu0 %v406
    %832 = vmatpush1.msra.mxu0 %v405
    %833 = vmatprep.subr.mxu0 %v410
    %834 = vmatpush1.msra.mxu0 %v409
    %835 = vmatprep.subr.mxu0 %v414
    %836 = vmatpush1.msra.mxu0 %v413
    %837 = vmatprep.subr.mxu0 %v418
    %838 = vmatpush1.msra.mxu0 %v417
    %839 = vmatprep.subr.mxu0 %v422
    %840 = vmatpush1.msra.mxu0 %v421
    %841 = vmatprep.subr.mxu0 %v426
    %842 = vmatpush1.msra.mxu0 %v425
    %843 = vmatprep.subr.mxu0 %v430
    %844 = vmatpush1.msra.mxu0 %v429
    %845 = vmatprep.subr.mxu0 %v434
    %846 = vmatpush1.msra.mxu0 %v433
    %847 = vmatprep.subr.mxu0 %v438
    %848 = vmatpush1.msra.mxu0 %v437
    %849 = vmatprep.subr.mxu0 %v442
    %850 = vmatpush1.msra.mxu0 %v441
    %851 = vmatprep.subr.mxu0 %v446
    %852 = vmatpush1.msra.mxu0 %v445
    %853 = vmatprep.subr.mxu0 %v450
    %854 = vmatpush1.msra.mxu0 %v449
    %855 = vmatprep.subr.mxu0 %v454
    %856 = vmatpush1.msra.mxu0 %v453
    %857 = vmatprep.mubr.f32.mxu0 %v641
    %858 = vmatmul.mubr.f32.gmra.mrb[0].mxu0 %v633
    %v859 = vpop.f32.mrb[0].mxu0
    %v860 = vadd.f32 %v789, %v859
    %v861 = vpop.f32.mrb[0].mxu0
    %v862 = vadd.f32 %v791, %v861
    %863 = vdwg.mxu0
    %864 = vmatprep.subr.mxu0 %v458
    %865 = vmatpush1.msra.mxu0 %v457
    %866 = vmatprep.subr.mxu0 %v462
    %867 = vmatpush1.msra.mxu0 %v461
    %868 = vmatprep.subr.mxu0 %v466
    %869 = vmatpush1.msra.mxu0 %v465
    %870 = vmatprep.subr.mxu0 %v470
    %871 = vmatpush1.msra.mxu0 %v469
    %872 = vmatprep.subr.mxu0 %v474
    %873 = vmatpush1.msra.mxu0 %v473
    %874 = vmatprep.subr.mxu0 %v478
    %875 = vmatpush1.msra.mxu0 %v477
    %876 = vmatprep.subr.mxu0 %v482
    %877 = vmatpush1.msra.mxu0 %v481
    %878 = vmatprep.subr.mxu0 %v486
    %879 = vmatpush1.msra.mxu0 %v485
    %880 = vmatprep.subr.mxu0 %v490
    %881 = vmatpush1.msra.mxu0 %v489
    %882 = vmatprep.subr.mxu0 %v494
    %883 = vmatpush1.msra.mxu0 %v493
    %884 = vmatprep.subr.mxu0 %v498
    %885 = vmatpush1.msra.mxu0 %v497
    %886 = vmatprep.subr.mxu0 %v502
    %887 = vmatpush1.msra.mxu0 %v501
    %888 = vmatprep.subr.mxu0 %v506
    %889 = vmatpush1.msra.mxu0 %v505
    %890 = vmatprep.subr.mxu0 %v510
    %891 = vmatpush1.msra.mxu0 %v509
    %892 = vmatprep.subr.mxu0 %v514
    %893 = vmatpush1.msra.mxu0 %v513
    %894 = vmatprep.subr.mxu0 %v518
    %895 = vmatpush1.msra.mxu0 %v517
    %896 = vmatprep.subr.mxu0 %v522
    %897 = vmatpush1.msra.mxu0 %v521
    %898 = vmatprep.subr.mxu0 %v526
    %899 = vmatpush1.msra.mxu0 %v525
    %900 = vmatprep.subr.mxu0 %v530
    %901 = vmatpush1.msra.mxu0 %v529
    %902 = vmatprep.subr.mxu0 %v534
    %903 = vmatpush1.msra.mxu0 %v533
    %904 = vmatprep.subr.mxu0 %v538
    %905 = vmatpush1.msra.mxu0 %v537
    %906 = vmatprep.subr.mxu0 %v542
    %907 = vmatpush1.msra.mxu0 %v541
    %908 = vmatprep.subr.mxu0 %v546
    %909 = vmatpush1.msra.mxu0 %v545
    %910 = vmatprep.subr.mxu0 %v550
    %911 = vmatpush1.msra.mxu0 %v549
    %912 = vmatprep.subr.mxu0 %v554
    %913 = vmatpush1.msra.mxu0 %v553
    %914 = vmatprep.subr.mxu0 %v558
    %915 = vmatpush1.msra.mxu0 %v557
    %916 = vmatprep.subr.mxu0 %v562
    %917 = vmatpush1.msra.mxu0 %v561
    %918 = vmatprep.subr.mxu0 %v566
    %919 = vmatpush1.msra.mxu0 %v565
    %920 = vmatprep.subr.mxu0 %v570
    %921 = vmatpush1.msra.mxu0 %v569
    %922 = vmatprep.subr.mxu0 %v574
    %923 = vmatpush1.msra.mxu0 %v573
    %924 = vmatprep.subr.mxu0 %v578
    %925 = vmatpush1.msra.mxu0 %v577
    %926 = vmatprep.subr.mxu0 %v582
    %927 = vmatpush1.msra.mxu0 %v581
    %928 = vmatprep.mubr.f32.mxu0 %v642
    %929 = vmatmul.mubr.f32.gmra.mrb[0].mxu0 %v640
    %v930 = vpop.f32.mrb[0].mxu0
    %v931 = vadd.f32 %v860, %v930
    %v932 = vpop.f32.mrb[0].mxu0
    %v933 = vadd.f32 %v862, %v932
    %934 = vdwg.mxu0
    %935 = vmatprep.subr.mxu0 %v76
    %936 = vmatpush1.msra.mxu0 %v75
    %937 = vmatprep.subr.mxu0 %v80
    %938 = vmatpush1.msra.mxu0 %v79
    %939 = vmatprep.subr.mxu0 %v84
    %940 = vmatpush1.msra.mxu0 %v83
    %941 = vmatprep.subr.mxu0 %v88
    %942 = vmatpush1.msra.mxu0 %v87
    %943 = vmatprep.subr.mxu0 %v92
    %944 = vmatpush1.msra.mxu0 %v91
    %945 = vmatprep.subr.mxu0 %v96
    %946 = vmatpush1.msra.mxu0 %v95
    %947 = vmatprep.subr.mxu0 %v100
    %948 = vmatpush1.msra.mxu0 %v99
    %949 = vmatprep.subr.mxu0 %v104
    %950 = vmatpush1.msra.mxu0 %v103
    %951 = vmatprep.subr.mxu0 %v108
    %952 = vmatpush1.msra.mxu0 %v107
    %953 = vmatprep.subr.mxu0 %v112
    %954 = vmatpush1.msra.mxu0 %v111
    %955 = vmatprep.subr.mxu0 %v116
    %956 = vmatpush1.msra.mxu0 %v115
    %957 = vmatprep.subr.mxu0 %v120
    %958 = vmatpush1.msra.mxu0 %v119
    %959 = vmatprep.subr.mxu0 %v124
    %960 = vmatpush1.msra.mxu0 %v123
    %961 = vmatprep.subr.mxu0 %v128
    %962 = vmatpush1.msra.mxu0 %v127
    %963 = vmatprep.subr.mxu0 %v132
    %964 = vmatpush1.msra.mxu0 %v131
    %965 = vmatprep.subr.mxu0 %v136
    %966 = vmatpush1.msra.mxu0 %v135
    %967 = vmatprep.subr.mxu0 %v140
    %968 = vmatpush1.msra.mxu0 %v139
    %969 = vmatprep.subr.mxu0 %v144
    %970 = vmatpush1.msra.mxu0 %v143
    %971 = vmatprep.subr.mxu0 %v148
    %972 = vmatpush1.msra.mxu0 %v147
    %973 = vmatprep.subr.mxu0 %v152
    %974 = vmatpush1.msra.mxu0 %v151
    %975 = vmatprep.subr.mxu0 %v156
    %976 = vmatpush1.msra.mxu0 %v155
    %977 = vmatprep.subr.mxu0 %v160
    %978 = vmatpush1.msra.mxu0 %v159
    %979 = vmatprep.subr.mxu0 %v164
    %980 = vmatpush1.msra.mxu0 %v163
    %981 = vmatprep.subr.mxu0 %v168
    %982 = vmatpush1.msra.mxu0 %v167
    %983 = vmatprep.subr.mxu0 %v172
    %984 = vmatpush1.msra.mxu0 %v171
    %985 = vmatprep.subr.mxu0 %v176
    %986 = vmatpush1.msra.mxu0 %v175
    %987 = vmatprep.subr.mxu0 %v180
    %988 = vmatpush1.msra.mxu0 %v179
    %989 = vmatprep.subr.mxu0 %v184
    %990 = vmatpush1.msra.mxu0 %v183
    %991 = vmatprep.subr.mxu0 %v188
    %992 = vmatpush1.msra.mxu0 %v187
    %993 = vmatprep.subr.mxu0 %v192
    %994 = vmatpush1.msra.mxu0 %v191
    %995 = vmatprep.subr.mxu0 %v196
    %996 = vmatpush1.msra.mxu0 %v195
    %997 = vmatprep.subr.mxu0 %v200
    %998 = vmatpush1.msra.mxu0 %v199
    %999 = vmatprep.mubr.f32.mxu0 %v624
    %1000 = vmatmul.mubr.f32.gmra.mrb[0].mxu0 %v616
    %v1001 = vpop.f32.mrb[0].mxu0
    %v1002 = vadd.f32 %v598, %v1001
    %v1003 = vpop.f32.mrb[0].mxu0
    %v1004 = vadd.f32 %v602, %v1003
    %1005 = vdwg.mxu0
    %1006 = vmatprep.subr.mxu0 %v204
    %1007 = vmatpush1.msra.mxu0 %v203
    %1008 = vmatprep.subr.mxu0 %v208
    %1009 = vmatpush1.msra.mxu0 %v207
    %1010 = vmatprep.subr.mxu0 %v212
    %1011 = vmatpush1.msra.mxu0 %v211
    %1012 = vmatprep.subr.mxu0 %v216
    %1013 = vmatpush1.msra.mxu0 %v215
    %1014 = vmatprep.subr.mxu0 %v220
    %1015 = vmatpush1.msra.mxu0 %v219
    %1016 = vmatprep.subr.mxu0 %v224
    %1017 = vmatpush1.msra.mxu0 %v223
    %1018 = vmatprep.subr.mxu0 %v228
    %1019 = vmatpush1.msra.mxu0 %v227
    %1020 = vmatprep.subr.mxu0 %v232
    %1021 = vmatpush1.msra.mxu0 %v231
    %1022 = vmatprep.subr.mxu0 %v236
    %1023 = vmatpush1.msra.mxu0 %v235
    %1024 = vmatprep.subr.mxu0 %v240
    %1025 = vmatpush1.msra.mxu0 %v239
    %1026 = vmatprep.subr.mxu0 %v244
    %1027 = vmatpush1.msra.mxu0 %v243
    %1028 = vmatprep.subr.mxu0 %v248
    %1029 = vmatpush1.msra.mxu0 %v247
    %1030 = vmatprep.subr.mxu0 %v252
    %1031 = vmatpush1.msra.mxu0 %v251
    %1032 = vmatprep.subr.mxu0 %v256
    %1033 = vmatpush1.msra.mxu0 %v255
    %1034 = vmatprep.subr.mxu0 %v260
    %1035 = vmatpush1.msra.mxu0 %v259
    %1036 = vmatprep.subr.mxu0 %v264
    %1037 = vmatpush1.msra.mxu0 %v263
    %1038 = vmatprep.subr.mxu0 %v268
    %1039 = vmatpush1.msra.mxu0 %v267
    %1040 = vmatprep.subr.mxu0 %v272
    %1041 = vmatpush1.msra.mxu0 %v271
    %1042 = vmatprep.subr.mxu0 %v276
    %1043 = vmatpush1.msra.mxu0 %v275
    %1044 = vmatprep.subr.mxu0 %v280
    %1045 = vmatpush1.msra.mxu0 %v279
    %1046 = vmatprep.subr.mxu0 %v284
    %1047 = vmatpush1.msra.mxu0 %v283
    %1048 = vmatprep.subr.mxu0 %v288
    %1049 = vmatpush1.msra.mxu0 %v287
    %1050 = vmatprep.subr.mxu0 %v292
    %1051 = vmatpush1.msra.mxu0 %v291
    %1052 = vmatprep.subr.mxu0 %v296
    %1053 = vmatpush1.msra.mxu0 %v295
    %1054 = vmatprep.subr.mxu0 %v300
    %1055 = vmatpush1.msra.mxu0 %v299
    %1056 = vmatprep.subr.mxu0 %v304
    %1057 = vmatpush1.msra.mxu0 %v303
    %1058 = vmatprep.subr.mxu0 %v308
    %1059 = vmatpush1.msra.mxu0 %v307
    %1060 = vmatprep.subr.mxu0 %v312
    %1061 = vmatpush1.msra.mxu0 %v311
    %1062 = vmatprep.subr.mxu0 %v316
    %1063 = vmatpush1.msra.mxu0 %v315
    %1064 = vmatprep.subr.mxu0 %v320
    %1065 = vmatpush1.msra.mxu0 %v319
    %1066 = vmatprep.subr.mxu0 %v324
    %1067 = vmatpush1.msra.mxu0 %v323
    %1068 = vmatprep.subr.mxu0 %v328
    %1069 = vmatpush1.msra.mxu0 %v327
    %1070 = vmatprep.mubr.f32.mxu0 %v625
    %1071 = vmatmul.mubr.f32.gmra.mrb[0].mxu0 %v623
    %v1072 = vpop.f32.mrb[0].mxu0
    %v1073 = vadd.f32 %v1002, %v1072
    %v1074 = vpop.f32.mrb[0].mxu0
    %v1075 = vadd.f32 %v1004, %v1074
    %1076 = vdwg.mxu0
    %1077 = vmatprep.subr.mxu0 %v332
    %1078 = vmatpush1.msra.mxu0 %v331
    %1079 = vmatprep.subr.mxu0 %v336
    %1080 = vmatpush1.msra.mxu0 %v335
    %1081 = vmatprep.subr.mxu0 %v340
    %1082 = vmatpush1.msra.mxu0 %v339
    %1083 = vmatprep.subr.mxu0 %v344
    %1084 = vmatpush1.msra.mxu0 %v343
    %1085 = vmatprep.subr.mxu0 %v348
    %1086 = vmatpush1.msra.mxu0 %v347
    %1087 = vmatprep.subr.mxu0 %v352
    %1088 = vmatpush1.msra.mxu0 %v351
    %1089 = vmatprep.subr.mxu0 %v356
    %1090 = vmatpush1.msra.mxu0 %v355
    %1091 = vmatprep.subr.mxu0 %v360
    %1092 = vmatpush1.msra.mxu0 %v359
    %1093 = vmatprep.subr.mxu0 %v364
    %1094 = vmatpush1.msra.mxu0 %v363
    %1095 = vmatprep.subr.mxu0 %v368
    %1096 = vmatpush1.msra.mxu0 %v367
    %1097 = vmatprep.subr.mxu0 %v372
    %1098 = vmatpush1.msra.mxu0 %v371
    %1099 = vmatprep.subr.mxu0 %v376
    %1100 = vmatpush1.msra.mxu0 %v375
    %1101 = vmatprep.subr.mxu0 %v380
    %1102 = vmatpush1.msra.mxu0 %v379
    %1103 = vmatprep.subr.mxu0 %v384
    %1104 = vmatpush1.msra.mxu0 %v383
    %1105 = vmatprep.subr.mxu0 %v388
    %1106 = vmatpush1.msra.mxu0 %v387
    %1107 = vmatprep.subr.mxu0 %v392
    %1108 = vmatpush1.msra.mxu0 %v391
    %1109 = vmatprep.subr.mxu0 %v396
    %1110 = vmatpush1.msra.mxu0 %v395
    %1111 = vmatprep.subr.mxu0 %v400
    %1112 = vmatpush1.msra.mxu0 %v399
    %1113 = vmatprep.subr.mxu0 %v404
    %1114 = vmatpush1.msra.mxu0 %v403
    %1115 = vmatprep.subr.mxu0 %v408
    %1116 = vmatpush1.msra.mxu0 %v407
    %1117 = vmatprep.subr.mxu0 %v412
    %1118 = vmatpush1.msra.mxu0 %v411
    %1119 = vmatprep.subr.mxu0 %v416
    %1120 = vmatpush1.msra.mxu0 %v415
    %1121 = vmatprep.subr.mxu0 %v420
    %1122 = vmatpush1.msra.mxu0 %v419
    %1123 = vmatprep.subr.mxu0 %v424
    %1124 = vmatpush1.msra.mxu0 %v423
    %1125 = vmatprep.subr.mxu0 %v428
    %1126 = vmatpush1.msra.mxu0 %v427
    %1127 = vmatprep.subr.mxu0 %v432
    %1128 = vmatpush1.msra.mxu0 %v431
    %1129 = vmatprep.subr.mxu0 %v436
    %1130 = vmatpush1.msra.mxu0 %v435
    %1131 = vmatprep.subr.mxu0 %v440
    %1132 = vmatpush1.msra.mxu0 %v439
    %1133 = vmatprep.subr.mxu0 %v444
    %1134 = vmatpush1.msra.mxu0 %v443
    %1135 = vmatprep.subr.mxu0 %v448
    %1136 = vmatpush1.msra.mxu0 %v447
    %1137 = vmatprep.subr.mxu0 %v452
    %1138 = vmatpush1.msra.mxu0 %v451
    %1139 = vmatprep.subr.mxu0 %v456
    %1140 = vmatpush1.msra.mxu0 %v455
    %1141 = vmatprep.mubr.f32.mxu0 %v641
    %1142 = vmatmul.mubr.f32.gmra.mrb[0].mxu0 %v633
    %v1143 = vpop.f32.mrb[0].mxu0
    %v1144 = vadd.f32 %v1073, %v1143
    %v1145 = vpop.f32.mrb[0].mxu0
    %v1146 = vadd.f32 %v1075, %v1145
    %1147 = vdwg.mxu0
    %1148 = vmatprep.subr.mxu0 %v460
    %1149 = vmatpush1.msra.mxu0 %v459
    %1150 = vmatprep.subr.mxu0 %v464
    %1151 = vmatpush1.msra.mxu0 %v463
    %1152 = vmatprep.subr.mxu0 %v468
    %1153 = vmatpush1.msra.mxu0 %v467
    %1154 = vmatprep.subr.mxu0 %v472
    %1155 = vmatpush1.msra.mxu0 %v471
    %1156 = vmatprep.subr.mxu0 %v476
    %1157 = vmatpush1.msra.mxu0 %v475
    %1158 = vmatprep.subr.mxu0 %v480
    %1159 = vmatpush1.msra.mxu0 %v479
    %1160 = vmatprep.subr.mxu0 %v484
    %1161 = vmatpush1.msra.mxu0 %v483
    %1162 = vmatprep.subr.mxu0 %v488
    %1163 = vmatpush1.msra.mxu0 %v487
    %1164 = vmatprep.subr.mxu0 %v492
    %1165 = vmatpush1.msra.mxu0 %v491
    %1166 = vmatprep.subr.mxu0 %v496
    %1167 = vmatpush1.msra.mxu0 %v495
    %1168 = vmatprep.subr.mxu0 %v500
    %1169 = vmatpush1.msra.mxu0 %v499
    %1170 = vmatprep.subr.mxu0 %v504
    %1171 = vmatpush1.msra.mxu0 %v503
    %1172 = vmatprep.subr.mxu0 %v508
    %1173 = vmatpush1.msra.mxu0 %v507
    %1174 = vmatprep.subr.mxu0 %v512
    %1175 = vmatpush1.msra.mxu0 %v511
    %1176 = vmatprep.subr.mxu0 %v516
    %1177 = vmatpush1.msra.mxu0 %v515
    %1178 = vmatprep.subr.mxu0 %v520
    %1179 = vmatpush1.msra.mxu0 %v519
    %1180 = vmatprep.subr.mxu0 %v524
    %1181 = vmatpush1.msra.mxu0 %v523
    %1182 = vmatprep.subr.mxu0 %v528
    %1183 = vmatpush1.msra.mxu0 %v527
    %1184 = vmatprep.subr.mxu0 %v532
    %1185 = vmatpush1.msra.mxu0 %v531
    %1186 = vmatprep.subr.mxu0 %v536
    %1187 = vmatpush1.msra.mxu0 %v535
    %1188 = vmatprep.subr.mxu0 %v540
    %1189 = vmatpush1.msra.mxu0 %v539
    %1190 = vmatprep.subr.mxu0 %v544
    %1191 = vmatpush1.msra.mxu0 %v543
    %1192 = vmatprep.subr.mxu0 %v548
    %1193 = vmatpush1.msra.mxu0 %v547
    %1194 = vmatprep.subr.mxu0 %v552
    %1195 = vmatpush1.msra.mxu0 %v551
    %1196 = vmatprep.subr.mxu0 %v556
    %1197 = vmatpush1.msra.mxu0 %v555
    %1198 = vmatprep.subr.mxu0 %v560
    %1199 = vmatpush1.msra.mxu0 %v559
    %1200 = vmatprep.subr.mxu0 %v564
    %1201 = vmatpush1.msra.mxu0 %v563
    %1202 = vmatprep.subr.mxu0 %v568
    %1203 = vmatpush1.msra.mxu0 %v567
    %1204 = vmatprep.subr.mxu0 %v572
    %1205 = vmatpush1.msra.mxu0 %v571
    %1206 = vmatprep.subr.mxu0 %v576
    %1207 = vmatpush1.msra.mxu0 %v575
    %1208 = vmatprep.subr.mxu0 %v580
    %1209 = vmatpush1.msra.mxu0 %v579
    %1210 = vmatprep.subr.mxu0 %v584
    %1211 = vmatpush1.msra.mxu0 %v583
    %1212 = vmatprep.mubr.f32.mxu0 %v642
    %1213 = vmatmul.mubr.f32.gmra.mrb[0].mxu0 %v640
    %v1214 = vpop.f32.mrb[0].mxu0
    %v1215 = vadd.f32 %v1144, %v1214
    %v1216 = vpop.f32.mrb[0].mxu0
    %v1217 = vadd.f32 %v1146, %v1216
    %1218 = vdwg.mxu0
    %v1219 = vxor.u32 %v1215, 2147483648
    %v1220 = vxor.u32 %v1217, 2147483648
    %v1221 = vmul.f32 %v1219, 1.442695
    %v1222 = vpow.pop %v1221
    %v1223 = vmul.f32 %v1220, 1.442695
    %v1224 = vpow.pop %v1223
    %v1225 = vadd.f32 %v1222, 1.0
    %v1226 = vadd.f32 %v1224, 1.0
    %v1227 = vrcp.pop %v1225
    %v1228 = vmul.f32 1.0, %v1227
    %v1229 = vrcp.pop %v1226
    %v1230 = vmul.f32 1.0, %v1229
    %v1231 = vmul.f32 %v931, %v1228
    %v1232 = vmul.f32 %v933, %v1230
    %v1233 = vmul.f32 %v1232, 0.5
    %v1234 = vmul.f32 %v1233, 1.442695
    %v1235 = vpow.pop %v1234
    %1236 = vst [vmem:[#allocation11] sm:$0x3] %v1231
    %1237 = vst [vmem:[#allocation13] sm:$0x3] %v1235
    %v1238 = vld [vmem:[#allocation8] sm:$0x3]
    %v1239 = vmul.f32 %v1238, %v1235
    %v1240 = vadd.f32 %v1231, %v1239
    %1241 = vst [vmem:[#allocation10] sm:$0x3] %v1240
    // Predicated region
    $region34: #{tpu_custom_call.1} parent=1 // pred_check
      _
    $region35: #{tpu_custom_call.1} parent=1 // pred_check_branch
      %1243 = sbr.rel (0) target = $region37
    $region36: #{tpu_custom_call.1} parent=1 // pred_region
      %s1245 = ssub.s32 32, 32
      %1246 = vsyncadd [#allocation4], %s1245
      %s1248 = sshll.u32 [#allocation10], 4
      %s1249 = int_to_ptr.vmem [resolvable:$true] %s1248
      %1251 = dma.vmem_to_hbm [thread:$0]  %s1249, 32, %s4, [#allocation4]
    $region37: #{tpu_custom_call.1} parent=1 // pred_fallthru
      _
    // Predicated region
    $region38: #{tpu_custom_call.1} parent=1 // pred_check
      _
    $region39: #{tpu_custom_call.1} parent=1 // pred_check_branch
      %1253 = sbr.rel (0) target = $region41
    $region40: #{tpu_custom_call.1} parent=1 // pred_region
      %s1255 = ssub.s32 32, 32
      %1256 = vsyncadd [#allocation12], %s1255
      %s1258 = sshll.u32 [#allocation11], 4
      %s1259 = int_to_ptr.vmem [resolvable:$true] %s1258
      %1261 = dma.vmem_to_hbm [thread:$0]  %s1259, 32, %s5, [#allocation12]
    $region41: #{tpu_custom_call.1} parent=1 // pred_fallthru
      _
    // Predicated region
    $region42: #{tpu_custom_call.1} parent=1 // pred_check
      _
    $region43: #{tpu_custom_call.1} parent=1 // pred_check_branch
      %1263 = sbr.rel (0) target = $region45
    $region44: #{tpu_custom_call.1} parent=1 // pred_region
      %s1265 = ssub.s32 32, 32
      %1266 = vsyncadd [#allocation12], %s1265
      %s1268 = sshll.u32 [#allocation13], 4
      %s1269 = int_to_ptr.vmem [resolvable:$true] %s1268
      %1271 = dma.vmem_to_hbm [thread:$0]  %s1269, 32, %s6, [#allocation12]
    $region45: #{tpu_custom_call.1} parent=1 // pred_fallthru
      _
    // Predicated region
    $region46: #{tpu_custom_call.1} parent=1 // pred_check
      _
    $region47: #{tpu_custom_call.1} parent=1 // pred_check_branch
      %1273 = sbr.rel (0) target = $region49
    $region48: #{tpu_custom_call.1} parent=1 // pred_region
      %1274 = dma.done [#allocation4], 32
    $region49: #{tpu_custom_call.1} parent=1 // pred_fallthru
      _
    // Predicated region
    $region50: #{tpu_custom_call.1} parent=1 // pred_check
      _
    $region51: #{tpu_custom_call.1} parent=1 // pred_check_branch
      %1276 = sbr.rel (0) target = $region53
    $region52: #{tpu_custom_call.1} parent=1 // pred_region
      %1277 = dma.done [#allocation12], 32
    $region53: #{tpu_custom_call.1} parent=1 // pred_fallthru
      _
    // Predicated region
    $region54: #{tpu_custom_call.1} parent=1 // pred_check
      _
    $region55: #{tpu_custom_call.1} parent=1 // pred_check_branch
      %1279 = sbr.rel (0) target = $region57
    $region56: #{tpu_custom_call.1} parent=1 // pred_region
      %1280 = dma.done [#allocation12], 32
    $region57: #{tpu_custom_call.1} parent=1 // pred_fallthru
      _
    %1281 = vsyncpa [#allocation3], 1
    %1282 = vsyncpa [#allocation6], 1
    %1283 = vsyncpa [#allocation9], 1
    %1284 = vsyncpa [#allocation4], 1
    %1285 = vsyncpa [#allocation12], 1

</llo_original>
